<compile_context>
chip_gen: v7x
topology: tpu7x:2x2x1
jax: 0.10.0
libtpu: 0.0.40
codegen_flags: <defaults>
</compile_context>

<pallas_src>
import functools
import math

import jax
import jax.numpy as jnp
from jax.experimental import pallas as pl
from jax.experimental.pallas import tpu as pltpu


# --------------------------------------------------------------------------- kernel

def _layer_norm(x, g, b, eps):
    mu = jnp.mean(x, axis=-1, keepdims=True)
    xc = x - mu
    var = jnp.mean(xc * xc, axis=-1, keepdims=True)
    return xc * jax.lax.rsqrt(var + eps) * g + b


def _block_kernel(*refs, eps, has_mask):
    """Fused Transformer_block forward for one (batch, query-tile) grid step."""
    if has_mask:
        (qh_ref, kh_ref, vh_ref, qres_ref, m_ref,
         wq_ref, wk_ref, wv_ref, wo_ref, bo_ref,
         ln1g_ref, ln1b_ref, w1_ref, b1_ref, w2_ref, b2_ref,
         ln2g_ref, ln2b_ref, o_ref) = refs
    else:
        m_ref = None
        (qh_ref, kh_ref, vh_ref, qres_ref,
         wq_ref, wk_ref, wv_ref, wo_ref, bo_ref,
         ln1g_ref, ln1b_ref, w1_ref, b1_ref, w2_ref, b2_ref,
         ln2g_ref, ln2b_ref, o_ref) = refs

    f32 = jnp.float32
    cdt = qh_ref.dtype                       # bf16 compute dtype (MXU inputs)

    qh = qh_ref[0]                           # (heads, tq, hd)
    kh = kh_ref[0]                           # (heads, Lk, hd)
    vh = vh_ref[0]                           # (heads, Lk, hd)

    # Shared per-head projections as batched-over-heads MXU matmuls.
    # NOTE: 1/sqrt(hidden) is already folded into wq by the wrapper.
    qp = jnp.einsum('hqd,hde->hqe', qh, wq_ref[...], preferred_element_type=f32)
    kp = jnp.einsum('hkd,hde->hke', kh, wk_ref[...], preferred_element_type=f32)
    vp = jnp.einsum('hkd,hde->hke', vh, wv_ref[...], preferred_element_type=f32)

    # Attention scores (heads, tq, Lk), f32 accumulation.
    s = jnp.einsum('hqd,hkd->hqk', qp.astype(cdt), kp.astype(cdt),
                   preferred_element_type=f32)
    if has_mask:
        # mask block is (1, 1-or-heads, tq, Lk); broadcast over heads in-kernel.
        s = jnp.where(m_ref[0] == 0.0, jnp.float32(-1e20), s)

    # Numerically stable softmax in f32; reciprocal runs on the EUP slot.
    s = s - jnp.max(s, axis=-1, keepdims=True)
    p = jnp.exp(s)
    p = p * pl.reciprocal(jnp.sum(p, axis=-1, keepdims=True), approx=True)

    hout = jnp.einsum('hqk,hkd->hqd', p.astype(cdt), vp.astype(cdt),
                      preferred_element_type=f32)            # (heads, tq, hd)

    # Head-concat fused into fc_out: batched contraction against wo[h] rows,
    # then a cheap reduce over heads (no lane-dim concat / transpose glue).
    att = jnp.einsum('hqd,hdo->hqo', hout.astype(cdt), wo_ref[...],
                     preferred_element_type=f32).sum(axis=0)  # (tq, H)
    att = att + bo_ref[...]

    # residual + LayerNorm1  (dropout == identity, inference forward)
    x = _layer_norm(att + qres_ref[0], ln1g_ref[...], ln1b_ref[...], eps)

    # feed-forward: Linear -> ReLU -> Linear  (bf16 MXU inputs, f32 accum)
    h1 = jnp.dot(x.astype(cdt), w1_ref[...], preferred_element_type=f32) + b1_ref[...]
    h1 = jnp.maximum(h1, 0.0)
    ff = jnp.dot(h1.astype(cdt), w2_ref[...], preferred_element_type=f32) + b2_ref[...]

    # residual + LayerNorm2  (dropout == identity)
    o_ref[0] = _layer_norm(ff + x, ln2g_ref[...], ln2b_ref[...], eps)


# --------------------------------------------------------------------------- wrapper

def _pick_q_tile(L, target=256):
    """Largest multiple-of-8 divisor of L that is <= target (or L itself)."""
    if L <= target:
        return L
    t = (target // 8) * 8
    while t >= 8:
        if L % t == 0:
            return t
        t -= 8
    return L


def transformer_block(params, queries, keys, values, mask=None, *,
                      heads, eps=1e-5, q_tile=256):
    """queries:(N,Lq,H) keys/values:(N,Lk,H) mask broadcastable to (N,heads,Lq,Lk) or None."""
    N, Lq, H = queries.shape
    Lk = keys.shape[1]
    hd = H // heads
    assert hd * heads == H, "hidden must be divisible by heads"
    f32, bf16 = jnp.float32, jnp.bfloat16
    scale = 1.0 / math.sqrt(H)          # reference divides logits by sqrt(hidden)

    tq = _pick_q_tile(Lq, q_tile)
    nqt = Lq // tq

    # Head-major activations for the attention path (bf16 MXU inputs).
    def split_heads(x, L):
        return x.reshape(N, L, heads, hd).transpose(0, 2, 1, 3).astype(bf16)

    q_h = split_heads(queries, Lq)      # (N, heads, Lq, hd)
    k_h = split_heads(keys, Lk)         # (N, heads, Lk, hd)
    v_h = split_heads(values, Lk)       # (N, heads, Lk, hd)
    q_res = queries.astype(f32)         # residual path stays f32

    # Shared per-head (hd,hd) weights, replicated over heads for a clean
    # batched matmul (heads-x smaller than the old kron block-diagonal).
    wq_b = jnp.broadcast_to((params["wq"] * scale).astype(bf16), (heads, hd, hd))
    wk_b = jnp.broadcast_to(params["wk"].astype(bf16), (heads, hd, hd))
    wv_b = jnp.broadcast_to(params["wv"].astype(bf16), (heads, hd, hd))
    wo_h = params["wo"].astype(bf16).reshape(heads, hd, H)
    FH = params["w1"].shape[1]

    args = [q_h, k_h, v_h, q_res]
    in_specs = [
        pl.BlockSpec((1, heads, tq, hd), lambda b, qi: (b, 0, qi, 0)),
        pl.BlockSpec((1, heads, Lk, hd), lambda b, qi: (b, 0, 0, 0)),
        pl.BlockSpec((1, heads, Lk, hd), lambda b, qi: (b, 0, 0, 0)),
        pl.BlockSpec((1, tq, H), lambda b, qi: (b, qi, 0)),
    ]

    has_mask = mask is not None
    if has_mask:
        m4 = mask
        if m4.ndim < 4:
            m4 = m4.reshape((1,) * (4 - m4.ndim) + m4.shape)
        mh = heads if m4.shape[1] == heads else 1          # keep heads un-broadcast
        m = jnp.broadcast_to(m4.astype(f32), (N, mh, Lq, Lk))
        args.append(m)
        in_specs.append(pl.BlockSpec((1, mh, tq, Lk), lambda b, qi: (b, 0, qi, 0)))

    def _const_spec(arr):                                   # resident weights
        zeros = (0,) * arr.ndim
        return pl.BlockSpec(arr.shape, lambda b, qi: zeros)

    weight_args = [
        wq_b, wk_b, wv_b, wo_h,
        params["bo"].reshape(1, H).astype(f32),
        params["ln1_g"].reshape(1, H).astype(f32),
        params["ln1_b"].reshape(1, H).astype(f32),
        params["w1"].astype(bf16),
        params["b1"].reshape(1, FH).astype(f32),
        params["w2"].astype(bf16),
        params["b2"].reshape(1, H).astype(f32),
        params["ln2_g"].reshape(1, H).astype(f32),
        params["ln2_b"].reshape(1, H).astype(f32),
    ]
    for w in weight_args:
        args.append(w)
        in_specs.append(_const_spec(w))

    kernel = functools.partial(_block_kernel, eps=eps, has_mask=has_mask)

    # Advisory cost estimate for the surrounding XLA schedule.
    flops = 2 * N * heads * hd * hd * (Lq + 2 * Lk)         # q/k/v projections
    flops += 2 * N * heads * Lq * Lk * hd * 2               # scores + PV
    flops += 2 * N * Lq * H * H                             # fc_out
    flops += 2 * N * Lq * H * FH * 2                        # MLP
    bytes_accessed = int(sum(int(a.size) * a.dtype.itemsize for a in args)
                         + N * Lq * H * 4)

    out = pl.pallas_call(
        kernel,
        out_shape=jax.ShapeDtypeStruct((N, Lq, H), f32),
        grid=(N, nqt),
        in_specs=in_specs,
        out_specs=pl.BlockSpec((1, tq, H), lambda b, qi: (b, qi, 0)),
        compiler_params=pltpu.CompilerParams(
            dimension_semantics=("parallel", "parallel"),
            vmem_limit_bytes=64 * 1024 * 1024),
        cost_estimate=pl.CostEstimate(flops=int(flops),
                                      transcendentals=int(N * heads * Lq * Lk),
                                      bytes_accessed=bytes_accessed),
    )(*args)
    return out


# --------------------------------------------------------------------------- pure-JAX reference (for correctness check)

def reference_block(params, queries, keys, values, mask, heads, eps=1e-5):
    N, Lq, H = queries.shape
    Lk = keys.shape[1]
    hd = H // heads
    q = queries.reshape(N, Lq, heads, hd) @ params["wq"]
    k = keys.reshape(N, Lk, heads, hd) @ params["wk"]
    v = values.reshape(N, Lk, heads, hd) @ params["wv"]
    w = jnp.einsum('nqhd,nkhd->nhqk', q, k)
    if mask is not None:
        w = jnp.where(jnp.broadcast_to(mask, w.shape) == 0, -1e20, w)
    a = jax.nn.softmax(w / math.sqrt(H), axis=-1)
    att = jnp.einsum('nhqk,nkhd->nqhd', a, v).reshape(N, Lq, H)
    att = att @ params["wo"] + params["bo"]

    def ln(x, g, b):
        mu = x.mean(-1, keepdims=True)
        var = ((x - mu) ** 2).mean(-1, keepdims=True)
        return (x - mu) / jnp.sqrt(var + eps) * g + b

    x = ln(att + queries, params["ln1_g"], params["ln1_b"])
    ff = jnp.maximum(x @ params["w1"] + params["b1"], 0.0) @ params["w2"] + params["b2"]
    return ln(ff + x, params["ln2_g"], params["ln2_b"])


# --------------------------------------------------------------------------- deterministic params

def init_block_params(key, hidden, heads, fexp, scale=0.1):
    hd = hidden // heads
    ks = jax.random.split(key, 9)
    nrm = lambda k, shp: scale * jax.random.normal(k, shp, jnp.float32)
    return dict(
        wq=nrm(ks[0], (hd, hd)),                 # (in, out) layout
        wk=nrm(ks[1], (hd, hd)),
        wv=nrm(ks[2], (hd, hd)),
        wo=nrm(ks[3], (hidden, hidden)),
        bo=nrm(ks[4], (hidden,)),
        ln1_g=jnp.ones((hidden,), jnp.float32), ln1_b=jnp.zeros((hidden,), jnp.float32),
        w1=nrm(ks[5], (hidden, fexp * hidden)), b1=nrm(ks[6], (fexp * hidden,)),
        w2=nrm(ks[7], (fexp * hidden, hidden)), b2=nrm(ks[8], (hidden,)),
        ln2_g=jnp.ones((hidden,), jnp.float32), ln2_b=jnp.zeros((hidden,), jnp.float32),
    )


# --------------------------------------------------------------------------- main

if __name__ == "__main__":
    N, L, HIDDEN, HEADS, FEXP = 2, 8, 32, 4, 4

    root = jax.random.PRNGKey(0)
    kp, kq, kk, kv = jax.random.split(root, 4)
    params = init_block_params(kp, HIDDEN, HEADS, FEXP)

    queries = jax.random.normal(kq, (N, L, HIDDEN), jnp.float32)
    keys_ = jax.random.normal(kk, (N, L, HIDDEN), jnp.float32)
    values = jax.random.normal(kv, (N, L, HIDDEN), jnp.float32)

    fwd = jax.jit(functools.partial(transformer_block, heads=HEADS))

    # 1) encoder-style call: mask=None  (specialised kernel, no mask input)
    out = fwd(params, queries, keys_, values, None)
    jax.block_until_ready(out)
    ref = reference_block(params, queries, keys_, values, None, HEADS)
    assert out.shape == (N, L, HIDDEN)
    assert bool(jnp.all(jnp.isfinite(out)))
    assert float(jnp.max(jnp.abs(out - ref))) < 5e-2

    # 2) masked self-attention call (causal mask) exercises the mask path
    causal = jnp.tril(jnp.ones((L, L), jnp.float32))[None, None]   # (1,1,L,L)
    out_m = fwd(params, queries, queries, queries, causal)
    jax.block_until_ready(out_m)
    ref_m = reference_block(params, queries, queries, queries, causal, HEADS)
    assert bool(jnp.all(jnp.isfinite(out_m)))
    assert float(jnp.max(jnp.abs(out_m - ref_m))) < 5e-2

    print("KERNEL_OK")
</pallas_src>

<mosaic_0001>
module attributes {stable_mosaic.version = 11 : i64} {
  func.func @_block_kernel(%arg0: i32, %arg1: i32, %arg2: memref<1x4x8x8xbf16, #tpu.memory_space<vmem>>, %arg3: memref<1x4x8x8xbf16, #tpu.memory_space<vmem>>, %arg4: memref<1x4x8x8xbf16, #tpu.memory_space<vmem>>, %arg5: memref<1x8x32xf32, #tpu.memory_space<vmem>>, %arg6: memref<4x8x8xbf16, #tpu.memory_space<vmem>>, %arg7: memref<4x8x8xbf16, #tpu.memory_space<vmem>>, %arg8: memref<4x8x8xbf16, #tpu.memory_space<vmem>>, %arg9: memref<4x8x32xbf16, #tpu.memory_space<vmem>>, %arg10: memref<1x32xf32, #tpu.memory_space<vmem>>, %arg11: memref<1x32xf32, #tpu.memory_space<vmem>>, %arg12: memref<1x32xf32, #tpu.memory_space<vmem>>, %arg13: memref<32x128xbf16, #tpu.memory_space<vmem>>, %arg14: memref<1x128xf32, #tpu.memory_space<vmem>>, %arg15: memref<128x32xbf16, #tpu.memory_space<vmem>>, %arg16: memref<1x32xf32, #tpu.memory_space<vmem>>, %arg17: memref<1x32xf32, #tpu.memory_space<vmem>>, %arg18: memref<1x32xf32, #tpu.memory_space<vmem>>, %arg19: memref<1x8x32xf32, #tpu.memory_space<vmem>>) attributes {dimension_semantics = [#tpu.dimension_semantics<parallel>, #tpu.dimension_semantics<parallel>], iteration_bounds = array<i64: 2, 1>, scalar_prefetch = 0 : i64, scratch_operands = 0 : i64, tpu.core_type = #tpu.core_type<tc>, window_params = [{transform_indices = @transform_0, window_bounds = array<i64: 1, 4, 8, 8>}, {transform_indices = @transform_1, window_bounds = array<i64: 1, 4, 8, 8>}, {transform_indices = @transform_2, window_bounds = array<i64: 1, 4, 8, 8>}, {transform_indices = @transform_3, window_bounds = array<i64: 1, 8, 32>}, {pipeline_mode = #tpu.pipeline_mode<synchronous>, transform_indices = @transform_4, window_bounds = array<i64: 4, 8, 8>}, {pipeline_mode = #tpu.pipeline_mode<synchronous>, transform_indices = @transform_5, window_bounds = array<i64: 4, 8, 8>}, {pipeline_mode = #tpu.pipeline_mode<synchronous>, transform_indices = @transform_6, window_bounds = array<i64: 4, 8, 8>}, {pipeline_mode = #tpu.pipeline_mode<synchronous>, transform_indices = @transform_7, window_bounds = array<i64: 4, 8, 32>}, {pipeline_mode = #tpu.pipeline_mode<synchronous>, transform_indices = @transform_8, window_bounds = array<i64: 1, 32>}, {pipeline_mode = #tpu.pipeline_mode<synchronous>, transform_indices = @transform_9, window_bounds = array<i64: 1, 32>}, {pipeline_mode = #tpu.pipeline_mode<synchronous>, transform_indices = @transform_10, window_bounds = array<i64: 1, 32>}, {pipeline_mode = #tpu.pipeline_mode<synchronous>, transform_indices = @transform_11, window_bounds = array<i64: 32, 128>}, {pipeline_mode = #tpu.pipeline_mode<synchronous>, transform_indices = @transform_12, window_bounds = array<i64: 1, 128>}, {pipeline_mode = #tpu.pipeline_mode<synchronous>, transform_indices = @transform_13, window_bounds = array<i64: 128, 32>}, {pipeline_mode = #tpu.pipeline_mode<synchronous>, transform_indices = @transform_14, window_bounds = array<i64: 1, 32>}, {pipeline_mode = #tpu.pipeline_mode<synchronous>, transform_indices = @transform_15, window_bounds = array<i64: 1, 32>}, {pipeline_mode = #tpu.pipeline_mode<synchronous>, transform_indices = @transform_16, window_bounds = array<i64: 1, 32>}, {transform_indices = @transform_17, window_bounds = array<i64: 1, 8, 32>}]} {
    %c0 = arith.constant 0 : index
    %c0_0 = arith.constant 0 : index
    %c0_1 = arith.constant 0 : index
    %c0_2 = arith.constant 0 : index
    %0 = vector.load %arg2[%c0, %c0_0, %c0_1, %c0_2] : memref<1x4x8x8xbf16, #tpu.memory_space<vmem>>, vector<1x4x8x8xbf16>
    %1 = vector.shape_cast %0 : vector<1x4x8x8xbf16> to vector<4x8x8xbf16>
    %c0_3 = arith.constant 0 : index
    %c0_4 = arith.constant 0 : index
    %c0_5 = arith.constant 0 : index
    %c0_6 = arith.constant 0 : index
    %2 = vector.load %arg3[%c0_3, %c0_4, %c0_5, %c0_6] : memref<1x4x8x8xbf16, #tpu.memory_space<vmem>>, vector<1x4x8x8xbf16>
    %3 = vector.shape_cast %2 : vector<1x4x8x8xbf16> to vector<4x8x8xbf16>
    %c0_7 = arith.constant 0 : index
    %c0_8 = arith.constant 0 : index
    %c0_9 = arith.constant 0 : index
    %c0_10 = arith.constant 0 : index
    %4 = vector.load %arg4[%c0_7, %c0_8, %c0_9, %c0_10] : memref<1x4x8x8xbf16, #tpu.memory_space<vmem>>, vector<1x4x8x8xbf16>
    %5 = vector.shape_cast %4 : vector<1x4x8x8xbf16> to vector<4x8x8xbf16>
    %c0_11 = arith.constant 0 : index
    %c0_12 = arith.constant 0 : index
    %c0_13 = arith.constant 0 : index
    %6 = vector.load %arg6[%c0_11, %c0_12, %c0_13] : memref<4x8x8xbf16, #tpu.memory_space<vmem>>, vector<4x8x8xbf16>
    "tpu.trace_start"() <{level = 10 : i32, message = "hqd,hde->hqe"}> : () -> ()
    %cst = arith.constant dense<0.000000e+00> : vector<4x8x8xf32>
    %7 = tpu.matmul %1, %6, %cst {dimension_numbers = #tpu.dot_dimension_numbers<[2], [1], [1], [2], [0, 0, 0, 1, 1, 2], [0], [0]>} : vector<4x8x8xbf16>, vector<4x8x8xbf16>, vector<4x8x8xf32> -> vector<4x8x8xf32>
    "tpu.trace_stop"() : () -> ()
    %c0_14 = arith.constant 0 : index
    %c0_15 = arith.constant 0 : index
    %c0_16 = arith.constant 0 : index
    %8 = vector.load %arg7[%c0_14, %c0_15, %c0_16] : memref<4x8x8xbf16, #tpu.memory_space<vmem>>, vector<4x8x8xbf16>
    "tpu.trace_start"() <{level = 10 : i32, message = "hkd,hde->hke"}> : () -> ()
    %cst_17 = arith.constant dense<0.000000e+00> : vector<4x8x8xf32>
    %9 = tpu.matmul %3, %8, %cst_17 {dimension_numbers = #tpu.dot_dimension_numbers<[2], [1], [1], [2], [0, 0, 0, 1, 1, 2], [0], [0]>} : vector<4x8x8xbf16>, vector<4x8x8xbf16>, vector<4x8x8xf32> -> vector<4x8x8xf32>
    "tpu.trace_stop"() : () -> ()
    %c0_18 = arith.constant 0 : index
    %c0_19 = arith.constant 0 : index
    %c0_20 = arith.constant 0 : index
    %10 = vector.load %arg8[%c0_18, %c0_19, %c0_20] : memref<4x8x8xbf16, #tpu.memory_space<vmem>>, vector<4x8x8xbf16>
    "tpu.trace_start"() <{level = 10 : i32, message = "hkd,hde->hke"}> : () -> ()
    %cst_21 = arith.constant dense<0.000000e+00> : vector<4x8x8xf32>
    %11 = tpu.matmul %5, %10, %cst_21 {dimension_numbers = #tpu.dot_dimension_numbers<[2], [1], [1], [2], [0, 0, 0, 1, 1, 2], [0], [0]>} : vector<4x8x8xbf16>, vector<4x8x8xbf16>, vector<4x8x8xf32> -> vector<4x8x8xf32>
    "tpu.trace_stop"() : () -> ()
    %12 = arith.truncf %7 : vector<4x8x8xf32> to vector<4x8x8xbf16>
    %13 = arith.truncf %9 : vector<4x8x8xf32> to vector<4x8x8xbf16>
    "tpu.trace_start"() <{level = 10 : i32, message = "hqd,hkd->hqk"}> : () -> ()
    %cst_22 = arith.constant dense<0.000000e+00> : vector<4x8x8xf32>
    %14 = tpu.matmul %12, %13, %cst_22 {dimension_numbers = #tpu.dot_dimension_numbers<[2], [2], [1], [1], [0, 0, 0, 1, 1, 1], [0], [0]>} : vector<4x8x8xbf16>, vector<4x8x8xbf16>, vector<4x8x8xf32> -> vector<4x8x8xf32>
    "tpu.trace_stop"() : () -> ()
    %cst_23 = arith.constant dense<0xFF800000> : vector<4x8xf32>
    %15 = vector.multi_reduction <maximumf>, %14, %cst_23 [2] : vector<4x8x8xf32> to vector<4x8xf32>
    %16 = vector.shape_cast %15 : vector<4x8xf32> to vector<4x8x1xf32>
    %17 = vector.broadcast %16 : vector<4x8x1xf32> to vector<4x8x8xf32>
    %18 = arith.subf %14, %17 : vector<4x8x8xf32>
    %19 = math.exp %18 : vector<4x8x8xf32>
    %cst_24 = arith.constant dense<0.000000e+00> : vector<4x8xf32>
    %20 = vector.multi_reduction <add>, %19, %cst_24 [2] : vector<4x8x8xf32> to vector<4x8xf32>
    %21 = vector.shape_cast %20 : vector<4x8xf32> to vector<4x8x1xf32>
    %22 = tpu.reciprocal %21 {approx = true} : vector<4x8x1xf32> -> vector<4x8x1xf32>
    %23 = vector.broadcast %22 : vector<4x8x1xf32> to vector<4x8x8xf32>
    %24 = arith.mulf %19, %23 : vector<4x8x8xf32>
    %25 = arith.truncf %24 : vector<4x8x8xf32> to vector<4x8x8xbf16>
    %26 = arith.truncf %11 : vector<4x8x8xf32> to vector<4x8x8xbf16>
    "tpu.trace_start"() <{level = 10 : i32, message = "hqk,hkd->hqd"}> : () -> ()
    %cst_25 = arith.constant dense<0.000000e+00> : vector<4x8x8xf32>
    %27 = tpu.matmul %25, %26, %cst_25 {dimension_numbers = #tpu.dot_dimension_numbers<[2], [1], [1], [2], [0, 0, 0, 1, 1, 2], [0], [0]>} : vector<4x8x8xbf16>, vector<4x8x8xbf16>, vector<4x8x8xf32> -> vector<4x8x8xf32>
    "tpu.trace_stop"() : () -> ()
    %28 = arith.truncf %27 : vector<4x8x8xf32> to vector<4x8x8xbf16>
    %c0_26 = arith.constant 0 : index
    %c0_27 = arith.constant 0 : index
    %c0_28 = arith.constant 0 : index
    %29 = vector.load %arg9[%c0_26, %c0_27, %c0_28] : memref<4x8x32xbf16, #tpu.memory_space<vmem>>, vector<4x8x32xbf16>
    "tpu.trace_start"() <{level = 10 : i32, message = "hqd,hdo->hqo"}> : () -> ()
    %cst_29 = arith.constant dense<0.000000e+00> : vector<4x8x32xf32>
    %30 = tpu.matmul %28, %29, %cst_29 {dimension_numbers = #tpu.dot_dimension_numbers<[2], [1], [1], [2], [0, 0, 0, 1, 1, 2], [0], [0]>} : vector<4x8x8xbf16>, vector<4x8x32xbf16>, vector<4x8x32xf32> -> vector<4x8x32xf32>
    "tpu.trace_stop"() : () -> ()
    %cst_30 = arith.constant dense<0.000000e+00> : vector<8x32xf32>
    %31 = vector.multi_reduction <add>, %30, %cst_30 [0] : vector<4x8x32xf32> to vector<8x32xf32>
    %c0_31 = arith.constant 0 : index
    %c0_32 = arith.constant 0 : index
    %32 = vector.load %arg10[%c0_31, %c0_32] : memref<1x32xf32, #tpu.memory_space<vmem>>, vector<1x32xf32>
    %33 = vector.broadcast %32 : vector<1x32xf32> to vector<8x32xf32>
    %34 = arith.addf %31, %33 : vector<8x32xf32>
    %c0_33 = arith.constant 0 : index
    %c0_34 = arith.constant 0 : index
    %c0_35 = arith.constant 0 : index
    %35 = vector.load %arg5[%c0_33, %c0_34, %c0_35] : memref<1x8x32xf32, #tpu.memory_space<vmem>>, vector<1x8x32xf32>
    %36 = vector.shape_cast %35 : vector<1x8x32xf32> to vector<8x32xf32>
    %37 = arith.addf %34, %36 : vector<8x32xf32>
    %c0_36 = arith.constant 0 : index
    %c0_37 = arith.constant 0 : index
    %38 = vector.load %arg11[%c0_36, %c0_37] : memref<1x32xf32, #tpu.memory_space<vmem>>, vector<1x32xf32>
    %c0_38 = arith.constant 0 : index
    %c0_39 = arith.constant 0 : index
    %39 = vector.load %arg12[%c0_38, %c0_39] : memref<1x32xf32, #tpu.memory_space<vmem>>, vector<1x32xf32>
    %cst_40 = arith.constant dense<0.000000e+00> : vector<8xf32>
    %40 = vector.multi_reduction <add>, %37, %cst_40 [1] : vector<8x32xf32> to vector<8xf32>
    %41 = vector.shape_cast %40 : vector<8xf32> to vector<8x1xf32>
    %cst_41 = arith.constant 3.200000e+01 : f32
    %42 = vector.broadcast %cst_41 : f32 to vector<8x1xf32>
    %43 = arith.divf %41, %42 : vector<8x1xf32>
    %44 = vector.broadcast %43 : vector<8x1xf32> to vector<8x32xf32>
    %45 = arith.subf %37, %44 : vector<8x32xf32>
    %46 = arith.mulf %45, %45 : vector<8x32xf32>
    %cst_42 = arith.constant dense<0.000000e+00> : vector<8xf32>
    %47 = vector.multi_reduction <add>, %46, %cst_42 [1] : vector<8x32xf32> to vector<8xf32>
    %48 = vector.shape_cast %47 : vector<8xf32> to vector<8x1xf32>
    %cst_43 = arith.constant 3.200000e+01 : f32
    %49 = vector.broadcast %cst_43 : f32 to vector<8x1xf32>
    %50 = arith.divf %48, %49 : vector<8x1xf32>
    %cst_44 = arith.constant 9.99999974E-6 : f32
    %51 = vector.broadcast %cst_44 : f32 to vector<8x1xf32>
    %52 = arith.addf %50, %51 : vector<8x1xf32>
    %53 = math.rsqrt %52 : vector<8x1xf32>
    %54 = vector.broadcast %53 : vector<8x1xf32> to vector<8x32xf32>
    %55 = arith.mulf %45, %54 : vector<8x32xf32>
    %56 = vector.broadcast %38 : vector<1x32xf32> to vector<8x32xf32>
    %57 = arith.mulf %55, %56 : vector<8x32xf32>
    %58 = vector.broadcast %39 : vector<1x32xf32> to vector<8x32xf32>
    %59 = arith.addf %57, %58 : vector<8x32xf32>
    %60 = arith.truncf %59 : vector<8x32xf32> to vector<8x32xbf16>
    %c0_45 = arith.constant 0 : index
    %c0_46 = arith.constant 0 : index
    %61 = vector.load %arg13[%c0_45, %c0_46] : memref<32x128xbf16, #tpu.memory_space<vmem>>, vector<32x128xbf16>
    %cst_47 = arith.constant dense<0.000000e+00> : vector<8x128xf32>
    %62 = tpu.matmul %60, %61, %cst_47 {dimension_numbers = #tpu.dot_dimension_numbers<[1], [0], [0], [1], [0, 0, 1, 1], [], []>} : vector<8x32xbf16>, vector<32x128xbf16>, vector<8x128xf32> -> vector<8x128xf32>
    %c0_48 = arith.constant 0 : index
    %c0_49 = arith.constant 0 : index
    %63 = vector.load %arg14[%c0_48, %c0_49] : memref<1x128xf32, #tpu.memory_space<vmem>>, vector<1x128xf32>
    %64 = vector.broadcast %63 : vector<1x128xf32> to vector<8x128xf32>
    %65 = arith.addf %62, %64 : vector<8x128xf32>
    %cst_50 = arith.constant 0.000000e+00 : f32
    %66 = vector.broadcast %cst_50 : f32 to vector<8x128xf32>
    %67 = arith.maximumf %65, %66 : vector<8x128xf32>
    %68 = arith.truncf %67 : vector<8x128xf32> to vector<8x128xbf16>
    %c0_51 = arith.constant 0 : index
    %c0_52 = arith.constant 0 : index
    %69 = vector.load %arg15[%c0_51, %c0_52] : memref<128x32xbf16, #tpu.memory_space<vmem>>, vector<128x32xbf16>
    %cst_53 = arith.constant dense<0.000000e+00> : vector<8x32xf32>
    %70 = tpu.matmul %68, %69, %cst_53 {dimension_numbers = #tpu.dot_dimension_numbers<[1], [0], [0], [1], [0, 0, 1, 1], [], []>} : vector<8x128xbf16>, vector<128x32xbf16>, vector<8x32xf32> -> vector<8x32xf32>
    %c0_54 = arith.constant 0 : index
    %c0_55 = arith.constant 0 : index
    %71 = vector.load %arg16[%c0_54, %c0_55] : memref<1x32xf32, #tpu.memory_space<vmem>>, vector<1x32xf32>
    %72 = vector.broadcast %71 : vector<1x32xf32> to vector<8x32xf32>
    %73 = arith.addf %70, %72 : vector<8x32xf32>
    %74 = arith.addf %73, %59 : vector<8x32xf32>
    %c0_56 = arith.constant 0 : index
    %c0_57 = arith.constant 0 : index
    %75 = vector.load %arg17[%c0_56, %c0_57] : memref<1x32xf32, #tpu.memory_space<vmem>>, vector<1x32xf32>
    %c0_58 = arith.constant 0 : index
    %c0_59 = arith.constant 0 : index
    %76 = vector.load %arg18[%c0_58, %c0_59] : memref<1x32xf32, #tpu.memory_space<vmem>>, vector<1x32xf32>
    %cst_60 = arith.constant dense<0.000000e+00> : vector<8xf32>
    %77 = vector.multi_reduction <add>, %74, %cst_60 [1] : vector<8x32xf32> to vector<8xf32>
    %78 = vector.shape_cast %77 : vector<8xf32> to vector<8x1xf32>
    %cst_61 = arith.constant 3.200000e+01 : f32
    %79 = vector.broadcast %cst_61 : f32 to vector<8x1xf32>
    %80 = arith.divf %78, %79 : vector<8x1xf32>
    %81 = vector.broadcast %80 : vector<8x1xf32> to vector<8x32xf32>
    %82 = arith.subf %74, %81 : vector<8x32xf32>
    %83 = arith.mulf %82, %82 : vector<8x32xf32>
    %cst_62 = arith.constant dense<0.000000e+00> : vector<8xf32>
    %84 = vector.multi_reduction <add>, %83, %cst_62 [1] : vector<8x32xf32> to vector<8xf32>
    %85 = vector.shape_cast %84 : vector<8xf32> to vector<8x1xf32>
    %cst_63 = arith.constant 3.200000e+01 : f32
    %86 = vector.broadcast %cst_63 : f32 to vector<8x1xf32>
    %87 = arith.divf %85, %86 : vector<8x1xf32>
    %cst_64 = arith.constant 9.99999974E-6 : f32
    %88 = vector.broadcast %cst_64 : f32 to vector<8x1xf32>
    %89 = arith.addf %87, %88 : vector<8x1xf32>
    %90 = math.rsqrt %89 : vector<8x1xf32>
    %91 = vector.broadcast %90 : vector<8x1xf32> to vector<8x32xf32>
    %92 = arith.mulf %82, %91 : vector<8x32xf32>
    %93 = vector.broadcast %75 : vector<1x32xf32> to vector<8x32xf32>
    %94 = arith.mulf %92, %93 : vector<8x32xf32>
    %95 = vector.broadcast %76 : vector<1x32xf32> to vector<8x32xf32>
    %96 = arith.addf %94, %95 : vector<8x32xf32>
    %c0_65 = arith.constant 0 : index
    %c0_66 = arith.constant 0 : index
    %c0_67 = arith.constant 0 : index
    %97 = vector.load %arg19[%c0_65, %c0_66, %c0_67] : memref<1x8x32xf32, #tpu.memory_space<vmem>>, vector<1x8x32xf32>
    %98 = vector.shape_cast %97 : vector<1x8x32xf32> to vector<8x32xf32>
    %99 = vector.shape_cast %96 : vector<8x32xf32> to vector<1x8x32xf32>
    tpu.vector_store %arg19[%c0_65, %c0_66, %c0_67], %99 {strides = array<i32>} : memref<1x8x32xf32, #tpu.memory_space<vmem>>, vector<1x8x32xf32>,
    return
  }
  func.func @transform_0(%arg0: i32, %arg1: i32) -> (i32, i32, i32, i32) {
    %c0_i32 = arith.constant 0 : i32
    %c0_i32_0 = arith.constant 0 : i32
    %c0_i32_1 = arith.constant 0 : i32
    return %arg0, %c0_i32, %arg1, %c0_i32_0 : i32, i32, i32, i32
  }
  func.func @transform_1(%arg0: i32, %arg1: i32) -> (i32, i32, i32, i32) {
    %c0_i32 = arith.constant 0 : i32
    %c0_i32_0 = arith.constant 0 : i32
    %c0_i32_1 = arith.constant 0 : i32
    %c0_i32_2 = arith.constant 0 : i32
    return %arg0, %c0_i32, %c0_i32_0, %c0_i32_1 : i32, i32, i32, i32
  }
  func.func @transform_2(%arg0: i32, %arg1: i32) -> (i32, i32, i32, i32) {
    %c0_i32 = arith.constant 0 : i32
    %c0_i32_0 = arith.constant 0 : i32
    %c0_i32_1 = arith.constant 0 : i32
    %c0_i32_2 = arith.constant 0 : i32
    return %arg0, %c0_i32, %c0_i32_0, %c0_i32_1 : i32, i32, i32, i32
  }
  func.func @transform_3(%arg0: i32, %arg1: i32) -> (i32, i32, i32) {
    %c0_i32 = arith.constant 0 : i32
    %c0_i32_0 = arith.constant 0 : i32
    return %arg0, %arg1, %c0_i32 : i32, i32, i32
  }
  func.func @transform_4(%arg0: i32, %arg1: i32) -> (i32, i32, i32) {
    %c0_i32 = arith.constant 0 : i32
    %c0_i32_0 = arith.constant 0 : i32
    %c0_i32_1 = arith.constant 0 : i32
    %c0_i32_2 = arith.constant 0 : i32
    return %c0_i32, %c0_i32_0, %c0_i32_1 : i32, i32, i32
  }
  func.func @transform_5(%arg0: i32, %arg1: i32) -> (i32, i32, i32) {
    %c0_i32 = arith.constant 0 : i32
    %c0_i32_0 = arith.constant 0 : i32
    %c0_i32_1 = arith.constant 0 : i32
    %c0_i32_2 = arith.constant 0 : i32
    return %c0_i32, %c0_i32_0, %c0_i32_1 : i32, i32, i32
  }
  func.func @transform_6(%arg0: i32, %arg1: i32) -> (i32, i32, i32) {
    %c0_i32 = arith.constant 0 : i32
    %c0_i32_0 = arith.constant 0 : i32
    %c0_i32_1 = arith.constant 0 : i32
    %c0_i32_2 = arith.constant 0 : i32
    return %c0_i32, %c0_i32_0, %c0_i32_1 : i32, i32, i32
  }
  func.func @transform_7(%arg0: i32, %arg1: i32) -> (i32, i32, i32) {
    %c0_i32 = arith.constant 0 : i32
    %c0_i32_0 = arith.constant 0 : i32
    %c0_i32_1 = arith.constant 0 : i32
    %c0_i32_2 = arith.constant 0 : i32
    return %c0_i32, %c0_i32_0, %c0_i32_1 : i32, i32, i32
  }
  func.func @transform_8(%arg0: i32, %arg1: i32) -> (i32, i32) {
    %c0_i32 = arith.constant 0 : i32
    %c0_i32_0 = arith.constant 0 : i32
    %c0_i32_1 = arith.constant 0 : i32
    return %c0_i32, %c0_i32_0 : i32, i32
  }
  func.func @transform_9(%arg0: i32, %arg1: i32) -> (i32, i32) {
    %c0_i32 = arith.constant 0 : i32
    %c0_i32_0 = arith.constant 0 : i32
    %c0_i32_1 = arith.constant 0 : i32
    return %c0_i32, %c0_i32_0 : i32, i32
  }
  func.func @transform_10(%arg0: i32, %arg1: i32) -> (i32, i32) {
    %c0_i32 = arith.constant 0 : i32
    %c0_i32_0 = arith.constant 0 : i32
    %c0_i32_1 = arith.constant 0 : i32
    return %c0_i32, %c0_i32_0 : i32, i32
  }
  func.func @transform_11(%arg0: i32, %arg1: i32) -> (i32, i32) {
    %c0_i32 = arith.constant 0 : i32
    %c0_i32_0 = arith.constant 0 : i32
    %c0_i32_1 = arith.constant 0 : i32
    return %c0_i32, %c0_i32_0 : i32, i32
  }
  func.func @transform_12(%arg0: i32, %arg1: i32) -> (i32, i32) {
    %c0_i32 = arith.constant 0 : i32
    %c0_i32_0 = arith.constant 0 : i32
    %c0_i32_1 = arith.constant 0 : i32
    return %c0_i32, %c0_i32_0 : i32, i32
  }
  func.func @transform_13(%arg0: i32, %arg1: i32) -> (i32, i32) {
    %c0_i32 = arith.constant 0 : i32
    %c0_i32_0 = arith.constant 0 : i32
    %c0_i32_1 = arith.constant 0 : i32
    return %c0_i32, %c0_i32_0 : i32, i32
  }
  func.func @transform_14(%arg0: i32, %arg1: i32) -> (i32, i32) {
    %c0_i32 = arith.constant 0 : i32
    %c0_i32_0 = arith.constant 0 : i32
    %c0_i32_1 = arith.constant 0 : i32
    return %c0_i32, %c0_i32_0 : i32, i32
  }
  func.func @transform_15(%arg0: i32, %arg1: i32) -> (i32, i32) {
    %c0_i32 = arith.constant 0 : i32
    %c0_i32_0 = arith.constant 0 : i32
    %c0_i32_1 = arith.constant 0 : i32
    return %c0_i32, %c0_i32_0 : i32, i32
  }
  func.func @transform_16(%arg0: i32, %arg1: i32) -> (i32, i32) {
    %c0_i32 = arith.constant 0 : i32
    %c0_i32_0 = arith.constant 0 : i32
    %c0_i32_1 = arith.constant 0 : i32
    return %c0_i32, %c0_i32_0 : i32, i32
  }
  func.func @transform_17(%arg0: i32, %arg1: i32) -> (i32, i32, i32) {
    %c0_i32 = arith.constant 0 : i32
    %c0_i32_0 = arith.constant 0 : i32
    return %arg0, %arg1, %c0_i32 : i32, i32, i32
  }
}

</mosaic_0001>

<llo_original>
// kernel: transformer_block.1
$region0: #{transformer_block.1}
  #allocation0 [shape = 'u32[]', space=smem, size = 0x4, offset = 0x4, fixed_abs, tag = 'smem constant byte address 0x4 - core index']
  #allocation1 [shape = 'u32[144,128]{1,0:T(1,128)}', space=vmem, size = 0x12000, scoped, tag = 'internal scratch']
  %s0 = inlined_call_operand.hbm [shape: bf16[2,4,8,8], index: 0, kind: input, shape index: {}]
  %s1 = inlined_call_operand.hbm [shape: bf16[2,4,8,8], index: 1, kind: input, shape index: {}]
  %s2 = inlined_call_operand.hbm [shape: bf16[2,4,8,8], index: 2, kind: input, shape index: {}]
  %s3 = inlined_call_operand.hbm [shape: f32[2,8,32], index: 3, kind: input, shape index: {}]
  %s4 = inlined_call_operand.hbm [shape: bf16[4,8,8], index: 4, kind: input, shape index: {}]
  %s5 = inlined_call_operand.hbm [shape: bf16[4,8,8], index: 5, kind: input, shape index: {}]
  %s6 = inlined_call_operand.hbm [shape: bf16[4,8,8], index: 6, kind: input, shape index: {}]
  %s7 = inlined_call_operand.hbm [shape: bf16[4,8,32], index: 7, kind: input, shape index: {}]
  %s8 = inlined_call_operand.hbm [shape: f32[1,32], index: 8, kind: input, shape index: {}]
  %s9 = inlined_call_operand.hbm [shape: f32[1,32], index: 9, kind: input, shape index: {}]
  %s10 = inlined_call_operand.hbm [shape: f32[1,32], index: 10, kind: input, shape index: {}]
  %s11 = inlined_call_operand.hbm [shape: bf16[32,128], index: 11, kind: input, shape index: {}]
  %s12 = inlined_call_operand.hbm [shape: f32[1,128], index: 12, kind: input, shape index: {}]
  %s13 = inlined_call_operand.hbm [shape: bf16[128,32], index: 13, kind: input, shape index: {}]
  %s14 = inlined_call_operand.hbm [shape: f32[1,32], index: 14, kind: input, shape index: {}]
  %s15 = inlined_call_operand.hbm [shape: f32[1,32], index: 15, kind: input, shape index: {}]
  %s16 = inlined_call_operand.hbm [shape: f32[1,32], index: 16, kind: input, shape index: {}]
  %s17 = inlined_call_operand.hbm [shape: f32[2,8,32], index: 17, kind: output, shape index: {}]
  %s18 = sld [smem:[#allocation0]]
  $region169: #{transformer_block.1} parent=0
    _
  %s20 = ssub.s32 1, %s18
  %s21 = scalar_select 0, %s20, %s18
  $region1: #{transformer_block.1} parent=0
    #allocation2 [shape = 'u8[16384]{0}', space=vmem, size = 0x4000, scoped, tag = 'input window, operand 0']
    #allocation3 [shape = 's32[2]{0}', space=sflag, size = 0x8, scoped, tag = 'scoped memory for transformer_block.1']
    #allocation4 [shape = 's32[2]{0}', space=sflag, size = 0x8, scoped, tag = 'scoped memory for transformer_block.1']
    #allocation5 [shape = 'u8[16384]{0}', space=vmem, size = 0x4000, scoped, tag = 'input window, operand 1']
    #allocation6 [shape = 's32[2]{0}', space=sflag, size = 0x8, scoped, tag = 'scoped memory for transformer_block.1']
    #allocation7 [shape = 'u8[16384]{0}', space=vmem, size = 0x4000, scoped, tag = 'input window, operand 2']
    #allocation8 [shape = 'u8[8192]{0}', space=vmem, size = 0x2000, scoped, tag = 'input window, operand 3']
    #allocation9 [shape = 's32[2]{0}', space=sflag, size = 0x8, scoped, tag = 'scoped memory for transformer_block.1']
    #allocation10 [shape = 'u8[8192]{0}', space=vmem, size = 0x2000, scoped, tag = 'input window, operand 4, single buffered']
    #allocation11 [shape = 'u8[8192]{0}', space=vmem, size = 0x2000, scoped, tag = 'input window, operand 5, single buffered']
    #allocation12 [shape = 's32[1]{0}', space=sflag, size = 0x4, scoped, tag = 'scoped memory for transformer_block.1']
    #allocation13 [shape = 'u8[8192]{0}', space=vmem, size = 0x2000, scoped, tag = 'input window, operand 6, single buffered']
    #allocation14 [shape = 'u8[8192]{0}', space=vmem, size = 0x2000, scoped, tag = 'input window, operand 7, single buffered']
    #allocation15 [shape = 's32[1]{0}', space=sflag, size = 0x4, scoped, tag = 'scoped memory for transformer_block.1']
    #allocation16 [shape = 'u8[512]{0}', space=vmem, size = 0x400, scoped, tag = 'input window, operand 8, single buffered']
    #allocation17 [shape = 'u8[512]{0}', space=vmem, size = 0x400, scoped, tag = 'input window, operand 9, single buffered']
    #allocation18 [shape = 's32[1]{0}', space=sflag, size = 0x4, scoped, tag = 'scoped memory for transformer_block.1']
    #allocation19 [shape = 'u8[512]{0}', space=vmem, size = 0x400, scoped, tag = 'input window, operand 10, single buffered']
    #allocation20 [shape = 'u8[8192]{0}', space=vmem, size = 0x2000, scoped, tag = 'input window, operand 11, single buffered']
    #allocation21 [shape = 's32[1]{0}', space=sflag, size = 0x4, scoped, tag = 'scoped memory for transformer_block.1']
    #allocation22 [shape = 'u8[512]{0}', space=vmem, size = 0x400, scoped, tag = 'input window, operand 12, single buffered']
    #allocation23 [shape = 'u8[32768]{0}', space=vmem, size = 0x8000, scoped, tag = 'input window, operand 13, single buffered']
    #allocation24 [shape = 's32[1]{0}', space=sflag, size = 0x4, scoped, tag = 'scoped memory for transformer_block.1']
    #allocation25 [shape = 'u8[512]{0}', space=vmem, size = 0x400, scoped, tag = 'input window, operand 14, single buffered']
    #allocation26 [shape = 'u8[512]{0}', space=vmem, size = 0x400, scoped, tag = 'input window, operand 15, single buffered']
    #allocation27 [shape = 's32[1]{0}', space=sflag, size = 0x4, scoped, tag = 'scoped memory for transformer_block.1']
    #allocation28 [shape = 'u8[512]{0}', space=vmem, size = 0x400, scoped, tag = 'input window, operand 16, single buffered']
    #allocation29 [shape = 'u8[8192]{0}', space=vmem, size = 0x2000, scoped, tag = 'output window, operand 0']
    %22 = vsyncpa [#allocation3], 0
    %s23 = scalar_lea.sflag [#allocation3], 1
    %24 = vsyncpa %s23, 0
    %25 = vsyncpa [#allocation6], 0
    %s26 = scalar_lea.sflag [#allocation6], 1
    %27 = vsyncpa %s26, 0
    %28 = vsyncpa [#allocation9], 0
    %s29 = scalar_lea.sflag [#allocation9], 1
    %30 = vsyncpa %s29, 0
    %31 = vsyncpa [#allocation12], 0
    %32 = vsyncpa [#allocation15], 0
    %33 = vsyncpa [#allocation18], 0
    %34 = vsyncpa [#allocation21], 0
    %35 = vsyncpa [#allocation24], 0
    %36 = vsyncpa [#allocation27], 0
    %37 = vsyncpa [#allocation4], 0
    %s38 = scalar_lea.sflag [#allocation4], 1
    %39 = vsyncpa %s38, 0
    loop: start=0, step=1, limit=4
    $region2: #{transformer_block.1} parent=1 // loop_pre_header
      _
    $region3: #{transformer_block.1} parent=1 // loop_header
      %s41 = sphi 0, %s45
      %p42 = scmp.ge.s32.totalorder %s41, 4
      %s48 = sphi 0, %s60
      %s49 = sphi 0, %s56
      %s50 = sphi 0, %s48
      %s51 = sphi 0, %s49
      %s52 = sphi 0, %s50
      %s53 = sphi 0, %s51
      %s65 = sphi 0, %s67
      %s68 = sphi 0, %s65
      %s69 = sphi 0, %s68
      %s85 = sphi 0, %s69
      %s91 = sphi 0, %s93
      %s94 = sphi 0, %s91
      %s95 = sphi 0, %s94
      %s111 = sphi 0, %s95
      %s117 = sphi 0, %s119
      %s120 = sphi 0, %s117
      %s121 = sphi 0, %s120
      %s137 = sphi 0, %s121
      %s145 = sphi 0, %s147
      %s148 = sphi 0, %s145
      %s149 = sphi 0, %s148
      %s165 = sphi 0, %s149
      %s169 = sphi 0, %s169
      %s171 = sphi 0, %s169
      %s172 = sphi 0, %s171
      %s186 = sphi 0, %s172
      %s190 = sphi 0, %s190
      %s192 = sphi 0, %s190
      %s193 = sphi 0, %s192
      %s207 = sphi 0, %s193
      %s211 = sphi 0, %s211
      %s213 = sphi 0, %s211
      %s214 = sphi 0, %s213
      %s228 = sphi 0, %s214
      %s232 = sphi 0, %s232
      %s234 = sphi 0, %s232
      %s235 = sphi 0, %s234
      %s249 = sphi 0, %s235
      %s253 = sphi 0, %s253
      %s255 = sphi 0, %s253
      %s256 = sphi 0, %s255
      %s270 = sphi 0, %s256
      %s274 = sphi 0, %s274
      %s276 = sphi 0, %s274
      %s277 = sphi 0, %s276
      %s291 = sphi 0, %s277
      %s295 = sphi 0, %s295
      %s297 = sphi 0, %s295
      %s298 = sphi 0, %s297
      %s312 = sphi 0, %s298
      %s316 = sphi 0, %s316
      %s318 = sphi 0, %s316
      %s319 = sphi 0, %s318
      %s333 = sphi 0, %s319
      %s337 = sphi 0, %s337
      %s339 = sphi 0, %s337
      %s340 = sphi 0, %s339
      %s354 = sphi 0, %s340
      %s358 = sphi 0, %s358
      %s360 = sphi 0, %s358
      %s361 = sphi 0, %s360
      %s375 = sphi 0, %s361
      %s379 = sphi 0, %s379
      %s381 = sphi 0, %s379
      %s382 = sphi 0, %s381
      %s396 = sphi 0, %s382
      %s400 = sphi 0, %s400
      %s402 = sphi 0, %s400
      %s403 = sphi 0, %s402
      %s417 = sphi 0, %s403
      %s421 = sphi 0, %s421
      %s423 = sphi 0, %s421
      %s424 = sphi 0, %s423
      %s438 = sphi 0, %s424
      %s446 = sphi 0, %s448
      %s449 = sphi 0, %s446
      %s450 = sphi 0, %s449
      %s466 = sphi 0, %s450
    $region4: #{transformer_block.1} parent=1 // loop_header_branch
      %44 = sbr.rel (%p42) target = $region8
    $region5: #{transformer_block.1} parent=1 // loop_body
      %s46 = ssub.s32 %s41, 1
      %s47 = ssub.s32 %s41, 2
      %s54 = sadd.s32 1, %s49
      %p55 = scmp.ge.s32.totalorder %s54, 1
      %s56 = scalar_select %p55, 0, %s54
      %s57 = sadd.s32 1, %s48
      %s58 = scalar_select %p55, %s57, %s48
      %p59 = scmp.ge.s32.totalorder %s58, 2
      %s60 = scalar_select %p59, 0, %s58
      %s61 = ssub.s32 %s48, %s60
      %s62 = ssub.s32 %s49, %s56
      %s63 = sor.u32 %s61, %s62
      %p64 = scmp.eq.s32.totalorder %s63, 0
      %s66 = sadd.s32 %s65, 1
      %s67 = scalar_select %p64, %s65, %s66
      %p70 = pneg %p64
      %p71 = scmp.eq.s32.totalorder %s41, 1
      %p72 = por %p70, %p71
      %p73 = scmp.ne.s32.totalorder %s65, %s68
      %p74 = scmp.eq.s32.totalorder %s41, 0
      %p75 = por %p73, %p74
      %p76 = scmp.ne.s32.totalorder %s65, %s68
      %p77 = scmp.eq.s32.totalorder %s46, 1
      %p78 = por %p76, %p77
      %p79 = scmp.ne.s32.totalorder %s68, %s69
      %p80 = scmp.eq.s32.totalorder %s46, 0
      %p81 = por %p79, %p80
      %p82 = scmp.ne.s32.totalorder %s68, %s69
      %p83 = scmp.eq.s32.totalorder %s47, 1
      %p84 = por %p82, %p83
      %p86 = scmp.ne.s32.totalorder %s69, %s85
      %p87 = scmp.eq.s32.totalorder %s47, 0
      %p88 = por %p86, %p87
      %s89 = ssub.s32 %s48, %s60
      %p90 = scmp.eq.s32.totalorder %s89, 0
      %s92 = sadd.s32 %s91, 1
      %s93 = scalar_select %p90, %s91, %s92
      %p96 = pneg %p90
      %p97 = scmp.eq.s32.totalorder %s41, 1
      %p98 = por %p96, %p97
      %p99 = scmp.ne.s32.totalorder %s91, %s94
      %p100 = scmp.eq.s32.totalorder %s41, 0
      %p101 = por %p99, %p100
      %p102 = scmp.ne.s32.totalorder %s91, %s94
      %p103 = scmp.eq.s32.totalorder %s46, 1
      %p104 = por %p102, %p103
      %p105 = scmp.ne.s32.totalorder %s94, %s95
      %p106 = scmp.eq.s32.totalorder %s46, 0
      %p107 = por %p105, %p106
      %p108 = scmp.ne.s32.totalorder %s94, %s95
      %p109 = scmp.eq.s32.totalorder %s47, 1
      %p110 = por %p108, %p109
      %p112 = scmp.ne.s32.totalorder %s95, %s111
      %p113 = scmp.eq.s32.totalorder %s47, 0
      %p114 = por %p112, %p113
      %s115 = ssub.s32 %s48, %s60
      %p116 = scmp.eq.s32.totalorder %s115, 0
      %s118 = sadd.s32 %s117, 1
      %s119 = scalar_select %p116, %s117, %s118
      %p122 = pneg %p116
      %p123 = scmp.eq.s32.totalorder %s41, 1
      %p124 = por %p122, %p123
      %p125 = scmp.ne.s32.totalorder %s117, %s120
      %p126 = scmp.eq.s32.totalorder %s41, 0
      %p127 = por %p125, %p126
      %p128 = scmp.ne.s32.totalorder %s117, %s120
      %p129 = scmp.eq.s32.totalorder %s46, 1
      %p130 = por %p128, %p129
      %p131 = scmp.ne.s32.totalorder %s120, %s121
      %p132 = scmp.eq.s32.totalorder %s46, 0
      %p133 = por %p131, %p132
      %p134 = scmp.ne.s32.totalorder %s120, %s121
      %p135 = scmp.eq.s32.totalorder %s47, 1
      %p136 = por %p134, %p135
      %p138 = scmp.ne.s32.totalorder %s121, %s137
      %p139 = scmp.eq.s32.totalorder %s47, 0
      %p140 = por %p138, %p139
      %s141 = ssub.s32 %s48, %s60
      %s142 = ssub.s32 %s49, %s56
      %s143 = sor.u32 %s141, %s142
      %p144 = scmp.eq.s32.totalorder %s143, 0
      %s146 = sadd.s32 %s145, 1
      %s147 = scalar_select %p144, %s145, %s146
      %p150 = pneg %p144
      %p151 = scmp.eq.s32.totalorder %s41, 1
      %p152 = por %p150, %p151
      %p153 = scmp.ne.s32.totalorder %s145, %s148
      %p154 = scmp.eq.s32.totalorder %s41, 0
      %p155 = por %p153, %p154
      %p156 = scmp.ne.s32.totalorder %s145, %s148
      %p157 = scmp.eq.s32.totalorder %s46, 1
      %p158 = por %p156, %p157
      %p159 = scmp.ne.s32.totalorder %s148, %s149
      %p160 = scmp.eq.s32.totalorder %s46, 0
      %p161 = por %p159, %p160
      %p162 = scmp.ne.s32.totalorder %s148, %s149
      %p163 = scmp.eq.s32.totalorder %s47, 1
      %p164 = por %p162, %p163
      %p166 = scmp.ne.s32.totalorder %s149, %s165
      %p167 = scmp.eq.s32.totalorder %s47, 0
      %p168 = por %p166, %p167
      %s170 = sadd.s32 %s169, 1
      %p173 = scmp.eq.s32.totalorder %s41, 1
      %p174 = scmp.ne.s32.totalorder %s169, %s171
      %p175 = scmp.eq.s32.totalorder %s41, 0
      %p176 = por %p174, %p175
      %p177 = scmp.ne.s32.totalorder %s169, %s171
      %p178 = scmp.eq.s32.totalorder %s46, 1
      %p179 = por %p177, %p178
      %p180 = scmp.ne.s32.totalorder %s171, %s172
      %p181 = scmp.eq.s32.totalorder %s46, 0
      %p182 = por %p180, %p181
      %p183 = scmp.ne.s32.totalorder %s171, %s172
      %p184 = scmp.eq.s32.totalorder %s47, 1
      %p185 = por %p183, %p184
      %p187 = scmp.ne.s32.totalorder %s172, %s186
      %p188 = scmp.eq.s32.totalorder %s47, 0
      %p189 = por %p187, %p188
      %s191 = sadd.s32 %s190, 1
      %p194 = scmp.eq.s32.totalorder %s41, 1
      %p195 = scmp.ne.s32.totalorder %s190, %s192
      %p196 = scmp.eq.s32.totalorder %s41, 0
      %p197 = por %p195, %p196
      %p198 = scmp.ne.s32.totalorder %s190, %s192
      %p199 = scmp.eq.s32.totalorder %s46, 1
      %p200 = por %p198, %p199
      %p201 = scmp.ne.s32.totalorder %s192, %s193
      %p202 = scmp.eq.s32.totalorder %s46, 0
      %p203 = por %p201, %p202
      %p204 = scmp.ne.s32.totalorder %s192, %s193
      %p205 = scmp.eq.s32.totalorder %s47, 1
      %p206 = por %p204, %p205
      %p208 = scmp.ne.s32.totalorder %s193, %s207
      %p209 = scmp.eq.s32.totalorder %s47, 0
      %p210 = por %p208, %p209
      %s212 = sadd.s32 %s211, 1
      %p215 = scmp.eq.s32.totalorder %s41, 1
      %p216 = scmp.ne.s32.totalorder %s211, %s213
      %p217 = scmp.eq.s32.totalorder %s41, 0
      %p218 = por %p216, %p217
      %p219 = scmp.ne.s32.totalorder %s211, %s213
      %p220 = scmp.eq.s32.totalorder %s46, 1
      %p221 = por %p219, %p220
      %p222 = scmp.ne.s32.totalorder %s213, %s214
      %p223 = scmp.eq.s32.totalorder %s46, 0
      %p224 = por %p222, %p223
      %p225 = scmp.ne.s32.totalorder %s213, %s214
      %p226 = scmp.eq.s32.totalorder %s47, 1
      %p227 = por %p225, %p226
      %p229 = scmp.ne.s32.totalorder %s214, %s228
      %p230 = scmp.eq.s32.totalorder %s47, 0
      %p231 = por %p229, %p230
      %s233 = sadd.s32 %s232, 1
      %p236 = scmp.eq.s32.totalorder %s41, 1
      %p237 = scmp.ne.s32.totalorder %s232, %s234
      %p238 = scmp.eq.s32.totalorder %s41, 0
      %p239 = por %p237, %p238
      %p240 = scmp.ne.s32.totalorder %s232, %s234
      %p241 = scmp.eq.s32.totalorder %s46, 1
      %p242 = por %p240, %p241
      %p243 = scmp.ne.s32.totalorder %s234, %s235
      %p244 = scmp.eq.s32.totalorder %s46, 0
      %p245 = por %p243, %p244
      %p246 = scmp.ne.s32.totalorder %s234, %s235
      %p247 = scmp.eq.s32.totalorder %s47, 1
      %p248 = por %p246, %p247
      %p250 = scmp.ne.s32.totalorder %s235, %s249
      %p251 = scmp.eq.s32.totalorder %s47, 0
      %p252 = por %p250, %p251
      %s254 = sadd.s32 %s253, 1
      %p257 = scmp.eq.s32.totalorder %s41, 1
      %p258 = scmp.ne.s32.totalorder %s253, %s255
      %p259 = scmp.eq.s32.totalorder %s41, 0
      %p260 = por %p258, %p259
      %p261 = scmp.ne.s32.totalorder %s253, %s255
      %p262 = scmp.eq.s32.totalorder %s46, 1
      %p263 = por %p261, %p262
      %p264 = scmp.ne.s32.totalorder %s255, %s256
      %p265 = scmp.eq.s32.totalorder %s46, 0
      %p266 = por %p264, %p265
      %p267 = scmp.ne.s32.totalorder %s255, %s256
      %p268 = scmp.eq.s32.totalorder %s47, 1
      %p269 = por %p267, %p268
      %p271 = scmp.ne.s32.totalorder %s256, %s270
      %p272 = scmp.eq.s32.totalorder %s47, 0
      %p273 = por %p271, %p272
      %s275 = sadd.s32 %s274, 1
      %p278 = scmp.eq.s32.totalorder %s41, 1
      %p279 = scmp.ne.s32.totalorder %s274, %s276
      %p280 = scmp.eq.s32.totalorder %s41, 0
      %p281 = por %p279, %p280
      %p282 = scmp.ne.s32.totalorder %s274, %s276
      %p283 = scmp.eq.s32.totalorder %s46, 1
      %p284 = por %p282, %p283
      %p285 = scmp.ne.s32.totalorder %s276, %s277
      %p286 = scmp.eq.s32.totalorder %s46, 0
      %p287 = por %p285, %p286
      %p288 = scmp.ne.s32.totalorder %s276, %s277
      %p289 = scmp.eq.s32.totalorder %s47, 1
      %p290 = por %p288, %p289
      %p292 = scmp.ne.s32.totalorder %s277, %s291
      %p293 = scmp.eq.s32.totalorder %s47, 0
      %p294 = por %p292, %p293
      %s296 = sadd.s32 %s295, 1
      %p299 = scmp.eq.s32.totalorder %s41, 1
      %p300 = scmp.ne.s32.totalorder %s295, %s297
      %p301 = scmp.eq.s32.totalorder %s41, 0
      %p302 = por %p300, %p301
      %p303 = scmp.ne.s32.totalorder %s295, %s297
      %p304 = scmp.eq.s32.totalorder %s46, 1
      %p305 = por %p303, %p304
      %p306 = scmp.ne.s32.totalorder %s297, %s298
      %p307 = scmp.eq.s32.totalorder %s46, 0
      %p308 = por %p306, %p307
      %p309 = scmp.ne.s32.totalorder %s297, %s298
      %p310 = scmp.eq.s32.totalorder %s47, 1
      %p311 = por %p309, %p310
      %p313 = scmp.ne.s32.totalorder %s298, %s312
      %p314 = scmp.eq.s32.totalorder %s47, 0
      %p315 = por %p313, %p314
      %s317 = sadd.s32 %s316, 1
      %p320 = scmp.eq.s32.totalorder %s41, 1
      %p321 = scmp.ne.s32.totalorder %s316, %s318
      %p322 = scmp.eq.s32.totalorder %s41, 0
      %p323 = por %p321, %p322
      %p324 = scmp.ne.s32.totalorder %s316, %s318
      %p325 = scmp.eq.s32.totalorder %s46, 1
      %p326 = por %p324, %p325
      %p327 = scmp.ne.s32.totalorder %s318, %s319
      %p328 = scmp.eq.s32.totalorder %s46, 0
      %p329 = por %p327, %p328
      %p330 = scmp.ne.s32.totalorder %s318, %s319
      %p331 = scmp.eq.s32.totalorder %s47, 1
      %p332 = por %p330, %p331
      %p334 = scmp.ne.s32.totalorder %s319, %s333
      %p335 = scmp.eq.s32.totalorder %s47, 0
      %p336 = por %p334, %p335
      %s338 = sadd.s32 %s337, 1
      %p341 = scmp.eq.s32.totalorder %s41, 1
      %p342 = scmp.ne.s32.totalorder %s337, %s339
      %p343 = scmp.eq.s32.totalorder %s41, 0
      %p344 = por %p342, %p343
      %p345 = scmp.ne.s32.totalorder %s337, %s339
      %p346 = scmp.eq.s32.totalorder %s46, 1
      %p347 = por %p345, %p346
      %p348 = scmp.ne.s32.totalorder %s339, %s340
      %p349 = scmp.eq.s32.totalorder %s46, 0
      %p350 = por %p348, %p349
      %p351 = scmp.ne.s32.totalorder %s339, %s340
      %p352 = scmp.eq.s32.totalorder %s47, 1
      %p353 = por %p351, %p352
      %p355 = scmp.ne.s32.totalorder %s340, %s354
      %p356 = scmp.eq.s32.totalorder %s47, 0
      %p357 = por %p355, %p356
      %s359 = sadd.s32 %s358, 1
      %p362 = scmp.eq.s32.totalorder %s41, 1
      %p363 = scmp.ne.s32.totalorder %s358, %s360
      %p364 = scmp.eq.s32.totalorder %s41, 0
      %p365 = por %p363, %p364
      %p366 = scmp.ne.s32.totalorder %s358, %s360
      %p367 = scmp.eq.s32.totalorder %s46, 1
      %p368 = por %p366, %p367
      %p369 = scmp.ne.s32.totalorder %s360, %s361
      %p370 = scmp.eq.s32.totalorder %s46, 0
      %p371 = por %p369, %p370
      %p372 = scmp.ne.s32.totalorder %s360, %s361
      %p373 = scmp.eq.s32.totalorder %s47, 1
      %p374 = por %p372, %p373
      %p376 = scmp.ne.s32.totalorder %s361, %s375
      %p377 = scmp.eq.s32.totalorder %s47, 0
      %p378 = por %p376, %p377
      %s380 = sadd.s32 %s379, 1
      %p383 = scmp.eq.s32.totalorder %s41, 1
      %p384 = scmp.ne.s32.totalorder %s379, %s381
      %p385 = scmp.eq.s32.totalorder %s41, 0
      %p386 = por %p384, %p385
      %p387 = scmp.ne.s32.totalorder %s379, %s381
      %p388 = scmp.eq.s32.totalorder %s46, 1
      %p389 = por %p387, %p388
      %p390 = scmp.ne.s32.totalorder %s381, %s382
      %p391 = scmp.eq.s32.totalorder %s46, 0
      %p392 = por %p390, %p391
      %p393 = scmp.ne.s32.totalorder %s381, %s382
      %p394 = scmp.eq.s32.totalorder %s47, 1
      %p395 = por %p393, %p394
      %p397 = scmp.ne.s32.totalorder %s382, %s396
      %p398 = scmp.eq.s32.totalorder %s47, 0
      %p399 = por %p397, %p398
      %s401 = sadd.s32 %s400, 1
      %p404 = scmp.eq.s32.totalorder %s41, 1
      %p405 = scmp.ne.s32.totalorder %s400, %s402
      %p406 = scmp.eq.s32.totalorder %s41, 0
      %p407 = por %p405, %p406
      %p408 = scmp.ne.s32.totalorder %s400, %s402
      %p409 = scmp.eq.s32.totalorder %s46, 1
      %p410 = por %p408, %p409
      %p411 = scmp.ne.s32.totalorder %s402, %s403
      %p412 = scmp.eq.s32.totalorder %s46, 0
      %p413 = por %p411, %p412
      %p414 = scmp.ne.s32.totalorder %s402, %s403
      %p415 = scmp.eq.s32.totalorder %s47, 1
      %p416 = por %p414, %p415
      %p418 = scmp.ne.s32.totalorder %s403, %s417
      %p419 = scmp.eq.s32.totalorder %s47, 0
      %p420 = por %p418, %p419
      %s422 = sadd.s32 %s421, 1
      %p425 = scmp.eq.s32.totalorder %s41, 1
      %p426 = scmp.ne.s32.totalorder %s421, %s423
      %p427 = scmp.eq.s32.totalorder %s41, 0
      %p428 = por %p426, %p427
      %p429 = scmp.ne.s32.totalorder %s421, %s423
      %p430 = scmp.eq.s32.totalorder %s46, 1
      %p431 = por %p429, %p430
      %p432 = scmp.ne.s32.totalorder %s423, %s424
      %p433 = scmp.eq.s32.totalorder %s46, 0
      %p434 = por %p432, %p433
      %p435 = scmp.ne.s32.totalorder %s423, %s424
      %p436 = scmp.eq.s32.totalorder %s47, 1
      %p437 = por %p435, %p436
      %p439 = scmp.ne.s32.totalorder %s424, %s438
      %p440 = scmp.eq.s32.totalorder %s47, 0
      %p441 = por %p439, %p440
      %s442 = ssub.s32 %s48, %s60
      %s443 = ssub.s32 %s49, %s56
      %s444 = sor.u32 %s442, %s443
      %p445 = scmp.eq.s32.totalorder %s444, 0
      %s447 = sadd.s32 %s446, 1
      %s448 = scalar_select %p445, %s446, %s447
      %p451 = pneg %p445
      %p452 = scmp.eq.s32.totalorder %s41, 1
      %p453 = por %p451, %p452
      %p454 = scmp.ne.s32.totalorder %s446, %s449
      %p455 = scmp.eq.s32.totalorder %s41, 0
      %p456 = por %p454, %p455
      %p457 = scmp.ne.s32.totalorder %s446, %s449
      %p458 = scmp.eq.s32.totalorder %s46, 1
      %p459 = por %p457, %p458
      %p460 = scmp.ne.s32.totalorder %s449, %s450
      %p461 = scmp.eq.s32.totalorder %s46, 0
      %p462 = por %p460, %p461
      %p463 = scmp.ne.s32.totalorder %s449, %s450
      %p464 = scmp.eq.s32.totalorder %s47, 1
      %p465 = por %p463, %p464
      %p467 = scmp.ne.s32.totalorder %s450, %s466
      %p468 = scmp.eq.s32.totalorder %s47, 0
      %p469 = por %p467, %p468
      %p470 = scmp.le.s32.totalorder 1, %s41
      %p471 = scmp.lt.s32.totalorder %s41, 3
      %p472 = pnand %p470, %p471
      %p473 = pneg %p472
      // Predicated region
      $region9: #{transformer_block.1} parent=5 // pred_check
        _
      $region10: #{transformer_block.1} parent=5 // pred_check_branch
        %475 = sbr.rel (%p472) target = $region12
      $region11: #{transformer_block.1} parent=5 // pred_region
        %s476 = ssub.s32 %s41, 1
        // Predicated region
        $region13: #{transformer_block.1} parent=11 // pred_check
          %p477 = pneg %p182
        $region14: #{transformer_block.1} parent=11 // pred_check_branch
          %479 = sbr.rel (%p477) target = $region16
        $region15: #{transformer_block.1} parent=11 // pred_region
          %s481 = ssub.s32 256, 256
          %482 = vsyncadd [#allocation9], %s481
          %s483 = sshll.u32 [#allocation10], 4
          %s484 = int_to_ptr.vmem [resolvable:$true] %s483
          %489 = dma.hbm_to_vmem [thread:$0]  %s4, 256, %s484, [#allocation9], 64, 64, 4
        $region16: #{transformer_block.1} parent=11 // pred_fallthru
          _
        // Predicated region
        $region17: #{transformer_block.1} parent=11 // pred_check
          %p490 = pneg %p203
        $region18: #{transformer_block.1} parent=11 // pred_check_branch
          %492 = sbr.rel (%p490) target = $region20
        $region19: #{transformer_block.1} parent=11 // pred_region
          %s494 = ssub.s32 256, 256
          %495 = vsyncadd [#allocation12], %s494
          %s496 = sshll.u32 [#allocation11], 4
          %s497 = int_to_ptr.vmem [resolvable:$true] %s496
          %502 = dma.hbm_to_vmem [thread:$0]  %s5, 256, %s497, [#allocation12], 64, 64, 4
        $region20: #{transformer_block.1} parent=11 // pred_fallthru
          _
        // Predicated region
        $region21: #{transformer_block.1} parent=11 // pred_check
          %p503 = pneg %p224
        $region22: #{transformer_block.1} parent=11 // pred_check_branch
          %505 = sbr.rel (%p503) target = $region24
        $region23: #{transformer_block.1} parent=11 // pred_region
          %s507 = ssub.s32 256, 256
          %508 = vsyncadd [#allocation12], %s507
          %s509 = sshll.u32 [#allocation13], 4
          %s510 = int_to_ptr.vmem [resolvable:$true] %s509
          %515 = dma.hbm_to_vmem [thread:$0]  %s6, 256, %s510, [#allocation12], 64, 64, 4
        $region24: #{transformer_block.1} parent=11 // pred_fallthru
          _
        // Predicated region
        $region25: #{transformer_block.1} parent=11 // pred_check
          %p516 = pneg %p245
        $region26: #{transformer_block.1} parent=11 // pred_check_branch
          %518 = sbr.rel (%p516) target = $region28
        $region27: #{transformer_block.1} parent=11 // pred_region
          %s520 = ssub.s32 256, 256
          %521 = vsyncadd [#allocation15], %s520
          %s522 = sshll.u32 [#allocation14], 4
          %s523 = int_to_ptr.vmem [resolvable:$true] %s522
          %528 = dma.hbm_to_vmem [thread:$0]  %s7, 256, %s523, [#allocation15], 64, 64, 4
        $region28: #{transformer_block.1} parent=11 // pred_fallthru
          _
        // Predicated region
        $region29: #{transformer_block.1} parent=11 // pred_check
          %p529 = pneg %p266
        $region30: #{transformer_block.1} parent=11 // pred_check_branch
          %531 = sbr.rel (%p529) target = $region32
        $region31: #{transformer_block.1} parent=11 // pred_region
          %s533 = ssub.s32 16, 16
          %534 = vsyncadd [#allocation15], %s533
          %s536 = sshll.u32 [#allocation16], 4
          %s537 = int_to_ptr.vmem [resolvable:$true] %s536
          %539 = dma.hbm_to_vmem [thread:$0]  %s8, 16, %s537, [#allocation15]
        $region32: #{transformer_block.1} parent=11 // pred_fallthru
          _
        // Predicated region
        $region33: #{transformer_block.1} parent=11 // pred_check
          %p540 = pneg %p287
        $region34: #{transformer_block.1} parent=11 // pred_check_branch
          %542 = sbr.rel (%p540) target = $region36
        $region35: #{transformer_block.1} parent=11 // pred_region
          %s544 = ssub.s32 16, 16
          %545 = vsyncadd [#allocation18], %s544
          %s547 = sshll.u32 [#allocation17], 4
          %s548 = int_to_ptr.vmem [resolvable:$true] %s547
          %550 = dma.hbm_to_vmem [thread:$0]  %s9, 16, %s548, [#allocation18]
        $region36: #{transformer_block.1} parent=11 // pred_fallthru
          _
        // Predicated region
        $region37: #{transformer_block.1} parent=11 // pred_check
          %p551 = pneg %p308
        $region38: #{transformer_block.1} parent=11 // pred_check_branch
          %553 = sbr.rel (%p551) target = $region40
        $region39: #{transformer_block.1} parent=11 // pred_region
          %s555 = ssub.s32 16, 16
          %556 = vsyncadd [#allocation18], %s555
          %s558 = sshll.u32 [#allocation19], 4
          %s559 = int_to_ptr.vmem [resolvable:$true] %s558
          %561 = dma.hbm_to_vmem [thread:$0]  %s10, 16, %s559, [#allocation18]
        $region40: #{transformer_block.1} parent=11 // pred_fallthru
          _
        // Predicated region
        $region41: #{transformer_block.1} parent=11 // pred_check
          %p562 = pneg %p329
        $region42: #{transformer_block.1} parent=11 // pred_check_branch
          %564 = sbr.rel (%p562) target = $region44
        $region43: #{transformer_block.1} parent=11 // pred_region
          %s566 = ssub.s32 256, 256
          %567 = vsyncadd [#allocation21], %s566
          %s568 = sshll.u32 [#allocation20], 4
          %s569 = int_to_ptr.vmem [resolvable:$true] %s568
          %574 = dma.hbm_to_vmem [thread:$0]  %s11, 256, %s569, [#allocation21], 64, 64, 4
        $region44: #{transformer_block.1} parent=11 // pred_fallthru
          _
        // Predicated region
        $region45: #{transformer_block.1} parent=11 // pred_check
          %p575 = pneg %p350
        $region46: #{transformer_block.1} parent=11 // pred_check_branch
          %577 = sbr.rel (%p575) target = $region48
        $region47: #{transformer_block.1} parent=11 // pred_region
          %s579 = ssub.s32 16, 16
          %580 = vsyncadd [#allocation21], %s579
          %s582 = sshll.u32 [#allocation22], 4
          %s583 = int_to_ptr.vmem [resolvable:$true] %s582
          %585 = dma.hbm_to_vmem [thread:$0]  %s12, 16, %s583, [#allocation21]
        $region48: #{transformer_block.1} parent=11 // pred_fallthru
          _
        // Predicated region
        $region49: #{transformer_block.1} parent=11 // pred_check
          %p586 = pneg %p371
        $region50: #{transformer_block.1} parent=11 // pred_check_branch
          %588 = sbr.rel (%p586) target = $region52
        $region51: #{transformer_block.1} parent=11 // pred_region
          %s590 = ssub.s32 1024, 1024
          %591 = vsyncadd [#allocation24], %s590
          %s592 = sshll.u32 [#allocation23], 4
          %s593 = int_to_ptr.vmem [resolvable:$true] %s592
          %598 = dma.hbm_to_vmem [thread:$0]  %s13, 1024, %s593, [#allocation24], 64, 64, 4
        $region52: #{transformer_block.1} parent=11 // pred_fallthru
          _
        // Predicated region
        $region53: #{transformer_block.1} parent=11 // pred_check
          %p599 = pneg %p392
        $region54: #{transformer_block.1} parent=11 // pred_check_branch
          %601 = sbr.rel (%p599) target = $region56
        $region55: #{transformer_block.1} parent=11 // pred_region
          %s603 = ssub.s32 16, 16
          %604 = vsyncadd [#allocation24], %s603
          %s606 = sshll.u32 [#allocation25], 4
          %s607 = int_to_ptr.vmem [resolvable:$true] %s606
          %609 = dma.hbm_to_vmem [thread:$0]  %s14, 16, %s607, [#allocation24]
        $region56: #{transformer_block.1} parent=11 // pred_fallthru
          _
        // Predicated region
        $region57: #{transformer_block.1} parent=11 // pred_check
          %p610 = pneg %p413
        $region58: #{transformer_block.1} parent=11 // pred_check_branch
          %612 = sbr.rel (%p610) target = $region60
        $region59: #{transformer_block.1} parent=11 // pred_region
          %s614 = ssub.s32 16, 16
          %615 = vsyncadd [#allocation27], %s614
          %s617 = sshll.u32 [#allocation26], 4
          %s618 = int_to_ptr.vmem [resolvable:$true] %s617
          %620 = dma.hbm_to_vmem [thread:$0]  %s15, 16, %s618, [#allocation27]
        $region60: #{transformer_block.1} parent=11 // pred_fallthru
          _
        // Predicated region
        $region61: #{transformer_block.1} parent=11 // pred_check
          %p621 = pneg %p434
        $region62: #{transformer_block.1} parent=11 // pred_check_branch
          %623 = sbr.rel (%p621) target = $region64
        $region63: #{transformer_block.1} parent=11 // pred_region
          %s625 = ssub.s32 16, 16
          %626 = vsyncadd [#allocation27], %s625
          %s628 = sshll.u32 [#allocation28], 4
          %s629 = int_to_ptr.vmem [resolvable:$true] %s628
          %631 = dma.hbm_to_vmem [thread:$0]  %s16, 16, %s629, [#allocation27]
        $region64: #{transformer_block.1} parent=11 // pred_fallthru
          _
      $region12: #{transformer_block.1} parent=5 // pred_fallthru
        _
      %p632 = scmp.lt.s32.totalorder %s41, 2
      // Predicated region
      $region65: #{transformer_block.1} parent=5 // pred_check
        %p633 = pneg %p632
      $region66: #{transformer_block.1} parent=5 // pred_check_branch
        %635 = sbr.rel (%p633) target = $region68
      $region67: #{transformer_block.1} parent=5 // pred_region
        // Predicated region
        $region69: #{transformer_block.1} parent=67 // pred_check
          %p636 = pneg %p75
        $region70: #{transformer_block.1} parent=67 // pred_check_branch
          %638 = sbr.rel (%p636) target = $region72
        $region71: #{transformer_block.1} parent=67 // pred_region
          %s639 = sand.u32 %s65, 1
          %s640 = scalar_lea.sflag [#allocation3], %s639
          %s641 = sand.u32 %s65, 1
          %s642 = smul.addr %s641, 16
          %s643 = scalar_lea.vmem [#allocation2], %s642
          %s645 = ssub.s32 256, 256
          %646 = vsyncadd %s640, %s645
          %s647 = smul.addr %s48, 4
          %s648 = sadd.s32 %s49, %s647
          %s649 = smul.addr %s648, 64
          %s650 = scalar_lea.hbm %s0, %s649
          %s651 = sshll.u32 %s643, 4
          %s652 = int_to_ptr.vmem [resolvable:$true] %s651
          %657 = dma.hbm_to_vmem [thread:$0]  %s650, 256, %s652, %s640, 64, 64, 4
        $region72: #{transformer_block.1} parent=67 // pred_fallthru
          _
        // Predicated region
        $region73: #{transformer_block.1} parent=67 // pred_check
          %p658 = pneg %p101
        $region74: #{transformer_block.1} parent=67 // pred_check_branch
          %660 = sbr.rel (%p658) target = $region76
        $region75: #{transformer_block.1} parent=67 // pred_region
          %s661 = sand.u32 %s41, 1
          %s662 = scalar_lea.sflag [#allocation6], %s661
          %s663 = sand.u32 %s91, 1
          %s664 = smul.addr %s663, 16
          %s665 = scalar_lea.vmem [#allocation5], %s664
          %s667 = ssub.s32 256, 256
          %668 = vsyncadd %s662, %s667
          %s669 = smul.addr %s48, 4
          %s670 = smul.addr %s669, 64
          %s671 = scalar_lea.hbm %s1, %s670
          %s672 = sshll.u32 %s665, 4
          %s673 = int_to_ptr.vmem [resolvable:$true] %s672
          %678 = dma.hbm_to_vmem [thread:$0]  %s671, 256, %s673, %s662, 64, 64, 4
        $region76: #{transformer_block.1} parent=67 // pred_fallthru
          _
        // Predicated region
        $region77: #{transformer_block.1} parent=67 // pred_check
          %p679 = pneg %p127
        $region78: #{transformer_block.1} parent=67 // pred_check_branch
          %681 = sbr.rel (%p679) target = $region80
        $region79: #{transformer_block.1} parent=67 // pred_region
          %s682 = sand.u32 %s41, 1
          %s683 = scalar_lea.sflag [#allocation6], %s682
          %s684 = sand.u32 %s117, 1
          %s685 = smul.addr %s684, 16
          %s686 = scalar_lea.vmem [#allocation7], %s685
          %s688 = ssub.s32 256, 256
          %689 = vsyncadd %s683, %s688
          %s690 = smul.addr %s48, 4
          %s691 = smul.addr %s690, 64
          %s692 = scalar_lea.hbm %s2, %s691
          %s693 = sshll.u32 %s686, 4
          %s694 = int_to_ptr.vmem [resolvable:$true] %s693
          %699 = dma.hbm_to_vmem [thread:$0]  %s692, 256, %s694, %s683, 64, 64, 4
        $region80: #{transformer_block.1} parent=67 // pred_fallthru
          _
        // Predicated region
        $region81: #{transformer_block.1} parent=67 // pred_check
          %p700 = pneg %p155
        $region82: #{transformer_block.1} parent=67 // pred_check_branch
          %702 = sbr.rel (%p700) target = $region84
        $region83: #{transformer_block.1} parent=67 // pred_region
          %s703 = sand.u32 %s41, 1
          %s704 = scalar_lea.sflag [#allocation9], %s703
          %s705 = sand.u32 %s145, 1
          %s706 = smul.addr %s705, 8
          %s707 = scalar_lea.vmem [#allocation8], %s706
          %s709 = ssub.s32 128, 128
          %710 = vsyncadd %s704, %s709
          %s711 = sadd.s32 %s49, %s48
          %s712 = smul.addr %s711, 128
          %s713 = scalar_lea.hbm %s3, %s712
          %s715 = sshll.u32 %s707, 4
          %s716 = int_to_ptr.vmem [resolvable:$true] %s715
          %718 = dma.hbm_to_vmem [thread:$0]  %s713, 128, %s716, %s704
        $region84: #{transformer_block.1} parent=67 // pred_fallthru
          _
      $region68: #{transformer_block.1} parent=5 // pred_fallthru
        _
      %p719 = scmp.le.s32.totalorder 1, %s41
      %p720 = scmp.lt.s32.totalorder %s41, 3
      %p721 = pnand %p719, %p720
      %p722 = pneg %p721
      // Predicated region
      $region85: #{transformer_block.1} parent=5 // pred_check
        _
      $region86: #{transformer_block.1} parent=5 // pred_check_branch
        %724 = sbr.rel (%p721) target = $region88
      $region87: #{transformer_block.1} parent=5 // pred_region
        %s725 = ssub.s32 %s41, 1
        %s726 = sand.u32 %s68, 1
        %s727 = scalar_lea.sflag [#allocation3], %s726
        %s728 = sand.u32 %s68, 1
        %s729 = smul.addr %s728, 16
        %s730 = scalar_lea.vmem [#allocation2], %s729
        // Predicated region
        $region89: #{transformer_block.1} parent=87 // pred_check
          %p731 = pneg %p81
        $region90: #{transformer_block.1} parent=87 // pred_check_branch
          %733 = sbr.rel (%p731) target = $region92
        $region91: #{transformer_block.1} parent=87 // pred_region
          %734 = dma.done %s727, 256
        $region92: #{transformer_block.1} parent=87 // pred_fallthru
          _
        %s735 = sand.u32 %s46, 1
        %s736 = scalar_lea.sflag [#allocation6], %s735
        %s737 = sand.u32 %s94, 1
        %s738 = smul.addr %s737, 16
        %s739 = scalar_lea.vmem [#allocation5], %s738
        // Predicated region
        $region93: #{transformer_block.1} parent=87 // pred_check
          %p740 = pneg %p107
        $region94: #{transformer_block.1} parent=87 // pred_check_branch
          %742 = sbr.rel (%p740) target = $region96
        $region95: #{transformer_block.1} parent=87 // pred_region
          %743 = dma.done %s736, 256
        $region96: #{transformer_block.1} parent=87 // pred_fallthru
          _
        %s744 = sand.u32 %s46, 1
        %s745 = scalar_lea.sflag [#allocation6], %s744
        %s746 = sand.u32 %s120, 1
        %s747 = smul.addr %s746, 16
        %s748 = scalar_lea.vmem [#allocation7], %s747
        // Predicated region
        $region97: #{transformer_block.1} parent=87 // pred_check
          %p749 = pneg %p133
        $region98: #{transformer_block.1} parent=87 // pred_check_branch
          %751 = sbr.rel (%p749) target = $region100
        $region99: #{transformer_block.1} parent=87 // pred_region
          %752 = dma.done %s745, 256
        $region100: #{transformer_block.1} parent=87 // pred_fallthru
          _
        %s753 = sand.u32 %s46, 1
        %s754 = scalar_lea.sflag [#allocation9], %s753
        %s755 = sand.u32 %s148, 1
        %s756 = smul.addr %s755, 8
        %s757 = scalar_lea.vmem [#allocation8], %s756
        // Predicated region
        $region101: #{transformer_block.1} parent=87 // pred_check
          %p758 = pneg %p161
        $region102: #{transformer_block.1} parent=87 // pred_check_branch
          %760 = sbr.rel (%p758) target = $region104
        $region103: #{transformer_block.1} parent=87 // pred_region
          %761 = dma.done %s754, 128
        $region104: #{transformer_block.1} parent=87 // pred_fallthru
          _
        // Predicated region
        $region105: #{transformer_block.1} parent=87 // pred_check
          %p762 = pneg %p182
        $region106: #{transformer_block.1} parent=87 // pred_check_branch
          %764 = sbr.rel (%p762) target = $region108
        $region107: #{transformer_block.1} parent=87 // pred_region
          %765 = dma.done [#allocation9], 256
        $region108: #{transformer_block.1} parent=87 // pred_fallthru
          _
        // Predicated region
        $region109: #{transformer_block.1} parent=87 // pred_check
          %p766 = pneg %p203
        $region110: #{transformer_block.1} parent=87 // pred_check_branch
          %768 = sbr.rel (%p766) target = $region112
        $region111: #{transformer_block.1} parent=87 // pred_region
          %769 = dma.done [#allocation12], 256
        $region112: #{transformer_block.1} parent=87 // pred_fallthru
          _
        // Predicated region
        $region113: #{transformer_block.1} parent=87 // pred_check
          %p770 = pneg %p224
        $region114: #{transformer_block.1} parent=87 // pred_check_branch
          %772 = sbr.rel (%p770) target = $region116
        $region115: #{transformer_block.1} parent=87 // pred_region
          %773 = dma.done [#allocation12], 256
        $region116: #{transformer_block.1} parent=87 // pred_fallthru
          _
        // Predicated region
        $region117: #{transformer_block.1} parent=87 // pred_check
          %p774 = pneg %p245
        $region118: #{transformer_block.1} parent=87 // pred_check_branch
          %776 = sbr.rel (%p774) target = $region120
        $region119: #{transformer_block.1} parent=87 // pred_region
          %777 = dma.done [#allocation15], 256
        $region120: #{transformer_block.1} parent=87 // pred_fallthru
          _
        // Predicated region
        $region121: #{transformer_block.1} parent=87 // pred_check
          %p778 = pneg %p266
        $region122: #{transformer_block.1} parent=87 // pred_check_branch
          %780 = sbr.rel (%p778) target = $region124
        $region123: #{transformer_block.1} parent=87 // pred_region
          %781 = dma.done [#allocation15], 16
        $region124: #{transformer_block.1} parent=87 // pred_fallthru
          _
        // Predicated region
        $region125: #{transformer_block.1} parent=87 // pred_check
          %p782 = pneg %p287
        $region126: #{transformer_block.1} parent=87 // pred_check_branch
          %784 = sbr.rel (%p782) target = $region128
        $region127: #{transformer_block.1} parent=87 // pred_region
          %785 = dma.done [#allocation18], 16
        $region128: #{transformer_block.1} parent=87 // pred_fallthru
          _
        // Predicated region
        $region129: #{transformer_block.1} parent=87 // pred_check
          %p786 = pneg %p308
        $region130: #{transformer_block.1} parent=87 // pred_check_branch
          %788 = sbr.rel (%p786) target = $region132
        $region131: #{transformer_block.1} parent=87 // pred_region
          %789 = dma.done [#allocation18], 16
        $region132: #{transformer_block.1} parent=87 // pred_fallthru
          _
        // Predicated region
        $region133: #{transformer_block.1} parent=87 // pred_check
          %p790 = pneg %p329
        $region134: #{transformer_block.1} parent=87 // pred_check_branch
          %792 = sbr.rel (%p790) target = $region136
        $region135: #{transformer_block.1} parent=87 // pred_region
          %793 = dma.done [#allocation21], 256
        $region136: #{transformer_block.1} parent=87 // pred_fallthru
          _
        // Predicated region
        $region137: #{transformer_block.1} parent=87 // pred_check
          %p794 = pneg %p350
        $region138: #{transformer_block.1} parent=87 // pred_check_branch
          %796 = sbr.rel (%p794) target = $region140
        $region139: #{transformer_block.1} parent=87 // pred_region
          %797 = dma.done [#allocation21], 16
        $region140: #{transformer_block.1} parent=87 // pred_fallthru
          _
        // Predicated region
        $region141: #{transformer_block.1} parent=87 // pred_check
          %p798 = pneg %p371
        $region142: #{transformer_block.1} parent=87 // pred_check_branch
          %800 = sbr.rel (%p798) target = $region144
        $region143: #{transformer_block.1} parent=87 // pred_region
          %801 = dma.done [#allocation24], 1024
        $region144: #{transformer_block.1} parent=87 // pred_fallthru
          _
        // Predicated region
        $region145: #{transformer_block.1} parent=87 // pred_check
          %p802 = pneg %p392
        $region146: #{transformer_block.1} parent=87 // pred_check_branch
          %804 = sbr.rel (%p802) target = $region148
        $region147: #{transformer_block.1} parent=87 // pred_region
          %805 = dma.done [#allocation24], 16
        $region148: #{transformer_block.1} parent=87 // pred_fallthru
          _
        // Predicated region
        $region149: #{transformer_block.1} parent=87 // pred_check
          %p806 = pneg %p413
        $region150: #{transformer_block.1} parent=87 // pred_check_branch
          %808 = sbr.rel (%p806) target = $region152
        $region151: #{transformer_block.1} parent=87 // pred_region
          %809 = dma.done [#allocation27], 16
        $region152: #{transformer_block.1} parent=87 // pred_fallthru
          _
        // Predicated region
        $region153: #{transformer_block.1} parent=87 // pred_check
          %p810 = pneg %p434
        $region154: #{transformer_block.1} parent=87 // pred_check_branch
          %812 = sbr.rel (%p810) target = $region156
        $region155: #{transformer_block.1} parent=87 // pred_region
          %813 = dma.done [#allocation27], 16
        $region156: #{transformer_block.1} parent=87 // pred_fallthru
          _
        %s814 = sand.u32 %s68, 1
        %s815 = scalar_lea.sflag [#allocation3], %s814
        %s816 = sand.u32 %s68, 1
        %s817 = smul.addr %s816, 16
        %s818 = scalar_lea.vmem [#allocation2], %s817
        %p819 = pneg %p81
        %p820 = pneg %p78
        %s821 = sand.u32 %s46, 1
        %s822 = scalar_lea.sflag [#allocation6], %s821
        %s823 = sand.u32 %s94, 1
        %s824 = smul.addr %s823, 16
        %s825 = scalar_lea.vmem [#allocation5], %s824
        %p826 = pneg %p107
        %p827 = pneg %p104
        %s828 = sand.u32 %s46, 1
        %s829 = scalar_lea.sflag [#allocation6], %s828
        %s830 = sand.u32 %s120, 1
        %s831 = smul.addr %s830, 16
        %s832 = scalar_lea.vmem [#allocation7], %s831
        %p833 = pneg %p133
        %p834 = pneg %p130
        %s835 = sand.u32 %s46, 1
        %s836 = scalar_lea.sflag [#allocation9], %s835
        %s837 = sand.u32 %s148, 1
        %s838 = smul.addr %s837, 8
        %s839 = scalar_lea.vmem [#allocation8], %s838
        %p840 = pneg %p161
        %p841 = pneg %p158
        %p842 = pneg %p182
        %p843 = pneg %p179
        %p844 = pneg %p203
        %p845 = pneg %p200
        %p846 = pneg %p224
        %p847 = pneg %p221
        %p848 = pneg %p245
        %p849 = pneg %p242
        %p850 = pneg %p266
        %p851 = pneg %p263
        %p852 = pneg %p287
        %p853 = pneg %p284
        %p854 = pneg %p308
        %p855 = pneg %p305
        %p856 = pneg %p329
        %p857 = pneg %p326
        %p858 = pneg %p350
        %p859 = pneg %p347
        %p860 = pneg %p371
        %p861 = pneg %p368
        %p862 = pneg %p392
        %p863 = pneg %p389
        %p864 = pneg %p413
        %p865 = pneg %p410
        %p866 = pneg %p434
        %p867 = pneg %p431
        %p868 = pneg %p462
        %p869 = pneg %p459
        %s870 = sand.u32 %s449, 1
        %s871 = scalar_lea.sflag [#allocation4], %s870
        %s872 = sand.u32 %s449, 1
        %s873 = smul.addr %s872, 8
        %s874 = scalar_lea.vmem [#allocation29], %s873
        %v876 = vld [vmem:[%s730] sm:$0xf]
        %v877 = vld [vmem:[%s730 + $0x4] sm:$0xf]
        %v878 = vld [vmem:[%s730 + $0x8] sm:$0xf]
        %v879 = vld [vmem:[%s730 + $0xc] sm:$0xf]
        %v880 = vld [vmem:[%s739] sm:$0xf]
        %v881 = vld [vmem:[%s739 + $0x4] sm:$0xf]
        %v882 = vld [vmem:[%s739 + $0x8] sm:$0xf]
        %v883 = vld [vmem:[%s739 + $0xc] sm:$0xf]
        %v884 = vld [vmem:[%s748] sm:$0xf]
        %v885 = vld [vmem:[%s748 + $0x4] sm:$0xf]
        %v886 = vld [vmem:[%s748 + $0x8] sm:$0xf]
        %v887 = vld [vmem:[%s748 + $0xc] sm:$0xf]
        %v888 = vld [vmem:[#allocation10] sm:$0xf]
        %v889 = vld [vmem:[#allocation10 + $0x4] sm:$0xf]
        %v890 = vld [vmem:[#allocation10 + $0x8] sm:$0xf]
        %v891 = vld [vmem:[#allocation10 + $0xc] sm:$0xf]
        %vm892 = vcmask 64512
        %v894 = vsel %vm892, %v876, 0
        %vm896 = vcmask 1043456
        %v898 = vsel %vm896, %v888, 0
        %900 = vmatprep.subr.bf16.mxu0 0
        %901 = vmatpush1.bf16.msra.mxu0 %v898
        %902 = vmatprep.subr.bf16.mxu0 0
        %903 = vmatpush1.bf16.msra.mxu0 0
        %904 = vmatprep.subr.bf16.mxu0 0
        %905 = vmatpush1.bf16.msra.mxu0 0
        %906 = vmatprep.subr.bf16.mxu0 0
        %907 = vmatpush1.bf16.msra.mxu0 0
        %908 = vmatprep.subr.bf16.mxu0 0
        %909 = vmatpush1.bf16.msra.mxu0 0
        %910 = vmatprep.subr.bf16.mxu0 0
        %911 = vmatpush1.bf16.msra.mxu0 0
        %912 = vmatprep.subr.bf16.mxu0 0
        %913 = vmatpush1.bf16.msra.mxu0 0
        %914 = vmatprep.subr.bf16.mxu0 0
        %915 = vmatpush1.bf16.msra.mxu0 0
        %916 = vmatprep.subr.bf16.mxu0 0
        %917 = vmatpush1.bf16.msra.mxu0 0
        %918 = vmatprep.subr.bf16.mxu0 0
        %919 = vmatpush1.bf16.msra.mxu0 0
        %920 = vmatprep.subr.bf16.mxu0 0
        %921 = vmatpush1.bf16.msra.mxu0 0
        %922 = vmatprep.subr.bf16.mxu0 0
        %923 = vmatpush1.bf16.msra.mxu0 0
        %924 = vmatprep.subr.bf16.mxu0 0
        %925 = vmatpush1.bf16.msra.mxu0 0
        %926 = vmatprep.subr.bf16.mxu0 0
        %927 = vmatpush1.bf16.msra.mxu0 0
        %928 = vmatprep.subr.bf16.mxu0 0
        %929 = vmatpush1.bf16.msra.mxu0 0
        %930 = vmatprep.subr.bf16.mxu0 0
        %931 = vmatpush1.bf16.msra.mxu0 0
        %932 = vmatprep.mubr.bf16.mxu0 0
        %933 = vmatmul.mubr.bf16.gmra.mrb[0].mxu0 %v894
        %v934 = vpop.f32.mrb[0].mxu0
        %v935 = vadd.f32 0.0, %v934
        %v936 = vpop.f32.mrb[0].mxu0
        %v937 = vpop.f32.mrb[0].mxu0
        %v938 = vpop.f32.mrb[0].mxu0
        %939 = vdwg.mxu0
        %v941 = vsel %vm892, %v877, 0
        %v944 = vsel %vm896, %v889, 0
        %946 = vmatprep.subr.bf16.mxu0 0
        %947 = vmatpush1.bf16.msra.mxu0 %v944
        %948 = vmatprep.subr.bf16.mxu0 0
        %949 = vmatpush1.bf16.msra.mxu0 0
        %950 = vmatprep.subr.bf16.mxu0 0
        %951 = vmatpush1.bf16.msra.mxu0 0
        %952 = vmatprep.subr.bf16.mxu0 0
        %953 = vmatpush1.bf16.msra.mxu0 0
        %954 = vmatprep.subr.bf16.mxu0 0
        %955 = vmatpush1.bf16.msra.mxu0 0
        %956 = vmatprep.subr.bf16.mxu0 0
        %957 = vmatpush1.bf16.msra.mxu0 0
        %958 = vmatprep.subr.bf16.mxu0 0
        %959 = vmatpush1.bf16.msra.mxu0 0
        %960 = vmatprep.subr.bf16.mxu0 0
        %961 = vmatpush1.bf16.msra.mxu0 0
        %962 = vmatprep.subr.bf16.mxu0 0
        %963 = vmatpush1.bf16.msra.mxu0 0
        %964 = vmatprep.subr.bf16.mxu0 0
        %965 = vmatpush1.bf16.msra.mxu0 0
        %966 = vmatprep.subr.bf16.mxu0 0
        %967 = vmatpush1.bf16.msra.mxu0 0
        %968 = vmatprep.subr.bf16.mxu0 0
        %969 = vmatpush1.bf16.msra.mxu0 0
        %970 = vmatprep.subr.bf16.mxu0 0
        %971 = vmatpush1.bf16.msra.mxu0 0
        %972 = vmatprep.subr.bf16.mxu0 0
        %973 = vmatpush1.bf16.msra.mxu0 0
        %974 = vmatprep.subr.bf16.mxu0 0
        %975 = vmatpush1.bf16.msra.mxu0 0
        %976 = vmatprep.subr.bf16.mxu0 0
        %977 = vmatpush1.bf16.msra.mxu0 0
        %978 = vmatprep.mubr.bf16.mxu0 0
        %979 = vmatmul.mubr.bf16.gmra.mrb[0].mxu0 %v941
        %v980 = vpop.f32.mrb[0].mxu0
        %v981 = vadd.f32 0.0, %v980
        %v982 = vpop.f32.mrb[0].mxu0
        %v983 = vpop.f32.mrb[0].mxu0
        %v984 = vpop.f32.mrb[0].mxu0
        %985 = vdwg.mxu0
        %v987 = vsel %vm892, %v878, 0
        %v990 = vsel %vm896, %v890, 0
        %992 = vmatprep.subr.bf16.mxu0 0
        %993 = vmatpush1.bf16.msra.mxu0 %v990
        %994 = vmatprep.subr.bf16.mxu0 0
        %995 = vmatpush1.bf16.msra.mxu0 0
        %996 = vmatprep.subr.bf16.mxu0 0
        %997 = vmatpush1.bf16.msra.mxu0 0
        %998 = vmatprep.subr.bf16.mxu0 0
        %999 = vmatpush1.bf16.msra.mxu0 0
        %1000 = vmatprep.subr.bf16.mxu0 0
        %1001 = vmatpush1.bf16.msra.mxu0 0
        %1002 = vmatprep.subr.bf16.mxu0 0
        %1003 = vmatpush1.bf16.msra.mxu0 0
        %1004 = vmatprep.subr.bf16.mxu0 0
        %1005 = vmatpush1.bf16.msra.mxu0 0
        %1006 = vmatprep.subr.bf16.mxu0 0
        %1007 = vmatpush1.bf16.msra.mxu0 0
        %1008 = vmatprep.subr.bf16.mxu0 0
        %1009 = vmatpush1.bf16.msra.mxu0 0
        %1010 = vmatprep.subr.bf16.mxu0 0
        %1011 = vmatpush1.bf16.msra.mxu0 0
        %1012 = vmatprep.subr.bf16.mxu0 0
        %1013 = vmatpush1.bf16.msra.mxu0 0
        %1014 = vmatprep.subr.bf16.mxu0 0
        %1015 = vmatpush1.bf16.msra.mxu0 0
        %1016 = vmatprep.subr.bf16.mxu0 0
        %1017 = vmatpush1.bf16.msra.mxu0 0
        %1018 = vmatprep.subr.bf16.mxu0 0
        %1019 = vmatpush1.bf16.msra.mxu0 0
        %1020 = vmatprep.subr.bf16.mxu0 0
        %1021 = vmatpush1.bf16.msra.mxu0 0
        %1022 = vmatprep.subr.bf16.mxu0 0
        %1023 = vmatpush1.bf16.msra.mxu0 0
        %1024 = vmatprep.mubr.bf16.mxu0 0
        %1025 = vmatmul.mubr.bf16.gmra.mrb[0].mxu0 %v987
        %v1026 = vpop.f32.mrb[0].mxu0
        %v1027 = vadd.f32 0.0, %v1026
        %v1028 = vpop.f32.mrb[0].mxu0
        %v1029 = vpop.f32.mrb[0].mxu0
        %v1030 = vpop.f32.mrb[0].mxu0
        %1031 = vdwg.mxu0
        %v1033 = vsel %vm892, %v879, 0
        %v1036 = vsel %vm896, %v891, 0
        %1038 = vmatprep.subr.bf16.mxu0 0
        %1039 = vmatpush1.bf16.msra.mxu0 %v1036
        %1040 = vmatprep.subr.bf16.mxu0 0
        %1041 = vmatpush1.bf16.msra.mxu0 0
        %1042 = vmatprep.subr.bf16.mxu0 0
        %1043 = vmatpush1.bf16.msra.mxu0 0
        %1044 = vmatprep.subr.bf16.mxu0 0
        %1045 = vmatpush1.bf16.msra.mxu0 0
        %1046 = vmatprep.subr.bf16.mxu0 0
        %1047 = vmatpush1.bf16.msra.mxu0 0
        %1048 = vmatprep.subr.bf16.mxu0 0
        %1049 = vmatpush1.bf16.msra.mxu0 0
        %1050 = vmatprep.subr.bf16.mxu0 0
        %1051 = vmatpush1.bf16.msra.mxu0 0
        %1052 = vmatprep.subr.bf16.mxu0 0
        %1053 = vmatpush1.bf16.msra.mxu0 0
        %1054 = vmatprep.subr.bf16.mxu0 0
        %1055 = vmatpush1.bf16.msra.mxu0 0
        %1056 = vmatprep.subr.bf16.mxu0 0
        %1057 = vmatpush1.bf16.msra.mxu0 0
        %1058 = vmatprep.subr.bf16.mxu0 0
        %1059 = vmatpush1.bf16.msra.mxu0 0
        %1060 = vmatprep.subr.bf16.mxu0 0
        %1061 = vmatpush1.bf16.msra.mxu0 0
        %1062 = vmatprep.subr.bf16.mxu0 0
        %1063 = vmatpush1.bf16.msra.mxu0 0
        %1064 = vmatprep.subr.bf16.mxu0 0
        %1065 = vmatpush1.bf16.msra.mxu0 0
        %1066 = vmatprep.subr.bf16.mxu0 0
        %1067 = vmatpush1.bf16.msra.mxu0 0
        %1068 = vmatprep.subr.bf16.mxu0 0
        %1069 = vmatpush1.bf16.msra.mxu0 0
        %1070 = vmatprep.mubr.bf16.mxu0 0
        %1071 = vmatmul.mubr.bf16.gmra.mrb[0].mxu0 %v1033
        %v1072 = vpop.f32.mrb[0].mxu0
        %v1073 = vadd.f32 0.0, %v1072
        %v1074 = vpop.f32.mrb[0].mxu0
        %v1075 = vpop.f32.mrb[0].mxu0
        %v1076 = vpop.f32.mrb[0].mxu0
        %1077 = vdwg.mxu0
        %v1078 = vld [vmem:[#allocation11] sm:$0xf]
        %v1079 = vld [vmem:[#allocation11 + $0x4] sm:$0xf]
        %v1080 = vld [vmem:[#allocation11 + $0x8] sm:$0xf]
        %v1081 = vld [vmem:[#allocation11 + $0xc] sm:$0xf]
        %v1083 = vsel %vm892, %v880, 0
        %v1086 = vsel %vm896, %v1078, 0
        %1088 = vmatprep.subr.bf16.mxu0 0
        %1089 = vmatpush1.bf16.msra.mxu0 %v1086
        %1090 = vmatprep.subr.bf16.mxu0 0
        %1091 = vmatpush1.bf16.msra.mxu0 0
        %1092 = vmatprep.subr.bf16.mxu0 0
        %1093 = vmatpush1.bf16.msra.mxu0 0
        %1094 = vmatprep.subr.bf16.mxu0 0
        %1095 = vmatpush1.bf16.msra.mxu0 0
        %1096 = vmatprep.subr.bf16.mxu0 0
        %1097 = vmatpush1.bf16.msra.mxu0 0
        %1098 = vmatprep.subr.bf16.mxu0 0
        %1099 = vmatpush1.bf16.msra.mxu0 0
        %1100 = vmatprep.subr.bf16.mxu0 0
        %1101 = vmatpush1.bf16.msra.mxu0 0
        %1102 = vmatprep.subr.bf16.mxu0 0
        %1103 = vmatpush1.bf16.msra.mxu0 0
        %1104 = vmatprep.subr.bf16.mxu0 0
        %1105 = vmatpush1.bf16.msra.mxu0 0
        %1106 = vmatprep.subr.bf16.mxu0 0
        %1107 = vmatpush1.bf16.msra.mxu0 0
        %1108 = vmatprep.subr.bf16.mxu0 0
        %1109 = vmatpush1.bf16.msra.mxu0 0
        %1110 = vmatprep.subr.bf16.mxu0 0
        %1111 = vmatpush1.bf16.msra.mxu0 0
        %1112 = vmatprep.subr.bf16.mxu0 0
        %1113 = vmatpush1.bf16.msra.mxu0 0
        %1114 = vmatprep.subr.bf16.mxu0 0
        %1115 = vmatpush1.bf16.msra.mxu0 0
        %1116 = vmatprep.subr.bf16.mxu0 0
        %1117 = vmatpush1.bf16.msra.mxu0 0
        %1118 = vmatprep.subr.bf16.mxu0 0
        %1119 = vmatpush1.bf16.msra.mxu0 0
        %1120 = vmatprep.mubr.bf16.mxu0 0
        %1121 = vmatmul.mubr.bf16.gmra.mrb[0].mxu0 %v1083
        %v1122 = vpop.f32.mrb[0].mxu0
        %v1123 = vadd.f32 0.0, %v1122
        %v1124 = vpop.f32.mrb[0].mxu0
        %v1125 = vpop.f32.mrb[0].mxu0
        %v1126 = vpop.f32.mrb[0].mxu0
        %1127 = vdwg.mxu0
        %v1129 = vsel %vm892, %v881, 0
        %v1132 = vsel %vm896, %v1079, 0
        %1134 = vmatprep.subr.bf16.mxu0 0
        %1135 = vmatpush1.bf16.msra.mxu0 %v1132
        %1136 = vmatprep.subr.bf16.mxu0 0
        %1137 = vmatpush1.bf16.msra.mxu0 0
        %1138 = vmatprep.subr.bf16.mxu0 0
        %1139 = vmatpush1.bf16.msra.mxu0 0
        %1140 = vmatprep.subr.bf16.mxu0 0
        %1141 = vmatpush1.bf16.msra.mxu0 0
        %1142 = vmatprep.subr.bf16.mxu0 0
        %1143 = vmatpush1.bf16.msra.mxu0 0
        %1144 = vmatprep.subr.bf16.mxu0 0
        %1145 = vmatpush1.bf16.msra.mxu0 0
        %1146 = vmatprep.subr.bf16.mxu0 0
        %1147 = vmatpush1.bf16.msra.mxu0 0
        %1148 = vmatprep.subr.bf16.mxu0 0
        %1149 = vmatpush1.bf16.msra.mxu0 0
        %1150 = vmatprep.subr.bf16.mxu0 0
        %1151 = vmatpush1.bf16.msra.mxu0 0
        %1152 = vmatprep.subr.bf16.mxu0 0
        %1153 = vmatpush1.bf16.msra.mxu0 0
        %1154 = vmatprep.subr.bf16.mxu0 0
        %1155 = vmatpush1.bf16.msra.mxu0 0
        %1156 = vmatprep.subr.bf16.mxu0 0
        %1157 = vmatpush1.bf16.msra.mxu0 0
        %1158 = vmatprep.subr.bf16.mxu0 0
        %1159 = vmatpush1.bf16.msra.mxu0 0
        %1160 = vmatprep.subr.bf16.mxu0 0
        %1161 = vmatpush1.bf16.msra.mxu0 0
        %1162 = vmatprep.subr.bf16.mxu0 0
        %1163 = vmatpush1.bf16.msra.mxu0 0
        %1164 = vmatprep.subr.bf16.mxu0 0
        %1165 = vmatpush1.bf16.msra.mxu0 0
        %1166 = vmatprep.mubr.bf16.mxu0 0
        %1167 = vmatmul.mubr.bf16.gmra.mrb[0].mxu0 %v1129
        %v1168 = vpop.f32.mrb[0].mxu0
        %v1169 = vadd.f32 0.0, %v1168
        %v1170 = vpop.f32.mrb[0].mxu0
        %v1171 = vpop.f32.mrb[0].mxu0
        %v1172 = vpop.f32.mrb[0].mxu0
        %1173 = vdwg.mxu0
        %v1175 = vsel %vm892, %v882, 0
        %v1178 = vsel %vm896, %v1080, 0
        %1180 = vmatprep.subr.bf16.mxu0 0
        %1181 = vmatpush1.bf16.msra.mxu0 %v1178
        %1182 = vmatprep.subr.bf16.mxu0 0
        %1183 = vmatpush1.bf16.msra.mxu0 0
        %1184 = vmatprep.subr.bf16.mxu0 0
        %1185 = vmatpush1.bf16.msra.mxu0 0
        %1186 = vmatprep.subr.bf16.mxu0 0
        %1187 = vmatpush1.bf16.msra.mxu0 0
        %1188 = vmatprep.subr.bf16.mxu0 0
        %1189 = vmatpush1.bf16.msra.mxu0 0
        %1190 = vmatprep.subr.bf16.mxu0 0
        %1191 = vmatpush1.bf16.msra.mxu0 0
        %1192 = vmatprep.subr.bf16.mxu0 0
        %1193 = vmatpush1.bf16.msra.mxu0 0
        %1194 = vmatprep.subr.bf16.mxu0 0
        %1195 = vmatpush1.bf16.msra.mxu0 0
        %1196 = vmatprep.subr.bf16.mxu0 0
        %1197 = vmatpush1.bf16.msra.mxu0 0
        %1198 = vmatprep.subr.bf16.mxu0 0
        %1199 = vmatpush1.bf16.msra.mxu0 0
        %1200 = vmatprep.subr.bf16.mxu0 0
        %1201 = vmatpush1.bf16.msra.mxu0 0
        %1202 = vmatprep.subr.bf16.mxu0 0
        %1203 = vmatpush1.bf16.msra.mxu0 0
        %1204 = vmatprep.subr.bf16.mxu0 0
        %1205 = vmatpush1.bf16.msra.mxu0 0
        %1206 = vmatprep.subr.bf16.mxu0 0
        %1207 = vmatpush1.bf16.msra.mxu0 0
        %1208 = vmatprep.subr.bf16.mxu0 0
        %1209 = vmatpush1.bf16.msra.mxu0 0
        %1210 = vmatprep.subr.bf16.mxu0 0
        %1211 = vmatpush1.bf16.msra.mxu0 0
        %1212 = vmatprep.mubr.bf16.mxu0 0
        %1213 = vmatmul.mubr.bf16.gmra.mrb[0].mxu0 %v1175
        %v1214 = vpop.f32.mrb[0].mxu0
        %v1215 = vadd.f32 0.0, %v1214
        %v1216 = vpop.f32.mrb[0].mxu0
        %v1217 = vpop.f32.mrb[0].mxu0
        %v1218 = vpop.f32.mrb[0].mxu0
        %1219 = vdwg.mxu0
        %v1221 = vsel %vm892, %v883, 0
        %v1224 = vsel %vm896, %v1081, 0
        %1226 = vmatprep.subr.bf16.mxu0 0
        %1227 = vmatpush1.bf16.msra.mxu0 %v1224
        %1228 = vmatprep.subr.bf16.mxu0 0
        %1229 = vmatpush1.bf16.msra.mxu0 0
        %1230 = vmatprep.subr.bf16.mxu0 0
        %1231 = vmatpush1.bf16.msra.mxu0 0
        %1232 = vmatprep.subr.bf16.mxu0 0
        %1233 = vmatpush1.bf16.msra.mxu0 0
        %1234 = vmatprep.subr.bf16.mxu0 0
        %1235 = vmatpush1.bf16.msra.mxu0 0
        %1236 = vmatprep.subr.bf16.mxu0 0
        %1237 = vmatpush1.bf16.msra.mxu0 0
        %1238 = vmatprep.subr.bf16.mxu0 0
        %1239 = vmatpush1.bf16.msra.mxu0 0
        %1240 = vmatprep.subr.bf16.mxu0 0
        %1241 = vmatpush1.bf16.msra.mxu0 0
        %1242 = vmatprep.subr.bf16.mxu0 0
        %1243 = vmatpush1.bf16.msra.mxu0 0
        %1244 = vmatprep.subr.bf16.mxu0 0
        %1245 = vmatpush1.bf16.msra.mxu0 0
        %1246 = vmatprep.subr.bf16.mxu0 0
        %1247 = vmatpush1.bf16.msra.mxu0 0
        %1248 = vmatprep.subr.bf16.mxu0 0
        %1249 = vmatpush1.bf16.msra.mxu0 0
        %1250 = vmatprep.subr.bf16.mxu0 0
        %1251 = vmatpush1.bf16.msra.mxu0 0
        %1252 = vmatprep.subr.bf16.mxu0 0
        %1253 = vmatpush1.bf16.msra.mxu0 0
        %1254 = vmatprep.subr.bf16.mxu0 0
        %1255 = vmatpush1.bf16.msra.mxu0 0
        %1256 = vmatprep.subr.bf16.mxu0 0
        %1257 = vmatpush1.bf16.msra.mxu0 0
        %1258 = vmatprep.mubr.bf16.mxu0 0
        %1259 = vmatmul.mubr.bf16.gmra.mrb[0].mxu0 %v1221
        %v1260 = vpop.f32.mrb[0].mxu0
        %v1261 = vadd.f32 0.0, %v1260
        %v1262 = vpop.f32.mrb[0].mxu0
        %v1263 = vpop.f32.mrb[0].mxu0
        %v1264 = vpop.f32.mrb[0].mxu0
        %1265 = vdwg.mxu0
        %v1266 = vld [vmem:[#allocation13] sm:$0xf]
        %v1267 = vld [vmem:[#allocation13 + $0x4] sm:$0xf]
        %v1268 = vld [vmem:[#allocation13 + $0x8] sm:$0xf]
        %v1269 = vld [vmem:[#allocation13 + $0xc] sm:$0xf]
        %v1271 = vsel %vm892, %v884, 0
        %v1274 = vsel %vm896, %v1266, 0
        %1276 = vmatprep.subr.bf16.mxu0 0
        %1277 = vmatpush1.bf16.msra.mxu0 %v1274
        %1278 = vmatprep.subr.bf16.mxu0 0
        %1279 = vmatpush1.bf16.msra.mxu0 0
        %1280 = vmatprep.subr.bf16.mxu0 0
        %1281 = vmatpush1.bf16.msra.mxu0 0
        %1282 = vmatprep.subr.bf16.mxu0 0
        %1283 = vmatpush1.bf16.msra.mxu0 0
        %1284 = vmatprep.subr.bf16.mxu0 0
        %1285 = vmatpush1.bf16.msra.mxu0 0
        %1286 = vmatprep.subr.bf16.mxu0 0
        %1287 = vmatpush1.bf16.msra.mxu0 0
        %1288 = vmatprep.subr.bf16.mxu0 0
        %1289 = vmatpush1.bf16.msra.mxu0 0
        %1290 = vmatprep.subr.bf16.mxu0 0
        %1291 = vmatpush1.bf16.msra.mxu0 0
        %1292 = vmatprep.subr.bf16.mxu0 0
        %1293 = vmatpush1.bf16.msra.mxu0 0
        %1294 = vmatprep.subr.bf16.mxu0 0
        %1295 = vmatpush1.bf16.msra.mxu0 0
        %1296 = vmatprep.subr.bf16.mxu0 0
        %1297 = vmatpush1.bf16.msra.mxu0 0
        %1298 = vmatprep.subr.bf16.mxu0 0
        %1299 = vmatpush1.bf16.msra.mxu0 0
        %1300 = vmatprep.subr.bf16.mxu0 0
        %1301 = vmatpush1.bf16.msra.mxu0 0
        %1302 = vmatprep.subr.bf16.mxu0 0
        %1303 = vmatpush1.bf16.msra.mxu0 0
        %1304 = vmatprep.subr.bf16.mxu0 0
        %1305 = vmatpush1.bf16.msra.mxu0 0
        %1306 = vmatprep.subr.bf16.mxu0 0
        %1307 = vmatpush1.bf16.msra.mxu0 0
        %1308 = vmatprep.mubr.bf16.mxu0 0
        %1309 = vmatmul.mubr.bf16.gmra.mrb[0].mxu0 %v1271
        %v1310 = vpop.f32.mrb[0].mxu0
        %v1311 = vadd.f32 0.0, %v1310
        %v1312 = vpop.f32.mrb[0].mxu0
        %v1313 = vpop.f32.mrb[0].mxu0
        %v1314 = vpop.f32.mrb[0].mxu0
        %1315 = vdwg.mxu0
        %v1317 = vsel %vm892, %v885, 0
        %v1320 = vsel %vm896, %v1267, 0
        %1322 = vmatprep.subr.bf16.mxu0 0
        %1323 = vmatpush1.bf16.msra.mxu0 %v1320
        %1324 = vmatprep.subr.bf16.mxu0 0
        %1325 = vmatpush1.bf16.msra.mxu0 0
        %1326 = vmatprep.subr.bf16.mxu0 0
        %1327 = vmatpush1.bf16.msra.mxu0 0
        %1328 = vmatprep.subr.bf16.mxu0 0
        %1329 = vmatpush1.bf16.msra.mxu0 0
        %1330 = vmatprep.subr.bf16.mxu0 0
        %1331 = vmatpush1.bf16.msra.mxu0 0
        %1332 = vmatprep.subr.bf16.mxu0 0
        %1333 = vmatpush1.bf16.msra.mxu0 0
        %1334 = vmatprep.subr.bf16.mxu0 0
        %1335 = vmatpush1.bf16.msra.mxu0 0
        %1336 = vmatprep.subr.bf16.mxu0 0
        %1337 = vmatpush1.bf16.msra.mxu0 0
        %1338 = vmatprep.subr.bf16.mxu0 0
        %1339 = vmatpush1.bf16.msra.mxu0 0
        %1340 = vmatprep.subr.bf16.mxu0 0
        %1341 = vmatpush1.bf16.msra.mxu0 0
        %1342 = vmatprep.subr.bf16.mxu0 0
        %1343 = vmatpush1.bf16.msra.mxu0 0
        %1344 = vmatprep.subr.bf16.mxu0 0
        %1345 = vmatpush1.bf16.msra.mxu0 0
        %1346 = vmatprep.subr.bf16.mxu0 0
        %1347 = vmatpush1.bf16.msra.mxu0 0
        %1348 = vmatprep.subr.bf16.mxu0 0
        %1349 = vmatpush1.bf16.msra.mxu0 0
        %1350 = vmatprep.subr.bf16.mxu0 0
        %1351 = vmatpush1.bf16.msra.mxu0 0
        %1352 = vmatprep.subr.bf16.mxu0 0
        %1353 = vmatpush1.bf16.msra.mxu0 0
        %1354 = vmatprep.mubr.bf16.mxu0 0
        %1355 = vmatmul.mubr.bf16.gmra.mrb[0].mxu0 %v1317
        %v1356 = vpop.f32.mrb[0].mxu0
        %v1357 = vadd.f32 0.0, %v1356
        %v1358 = vpop.f32.mrb[0].mxu0
        %v1359 = vpop.f32.mrb[0].mxu0
        %v1360 = vpop.f32.mrb[0].mxu0
        %1361 = vdwg.mxu0
        %v1363 = vsel %vm892, %v886, 0
        %v1366 = vsel %vm896, %v1268, 0
        %1368 = vmatprep.subr.bf16.mxu0 0
        %1369 = vmatpush1.bf16.msra.mxu0 %v1366
        %1370 = vmatprep.subr.bf16.mxu0 0
        %1371 = vmatpush1.bf16.msra.mxu0 0
        %1372 = vmatprep.subr.bf16.mxu0 0
        %1373 = vmatpush1.bf16.msra.mxu0 0
        %1374 = vmatprep.subr.bf16.mxu0 0
        %1375 = vmatpush1.bf16.msra.mxu0 0
        %1376 = vmatprep.subr.bf16.mxu0 0
        %1377 = vmatpush1.bf16.msra.mxu0 0
        %1378 = vmatprep.subr.bf16.mxu0 0
        %1379 = vmatpush1.bf16.msra.mxu0 0
        %1380 = vmatprep.subr.bf16.mxu0 0
        %1381 = vmatpush1.bf16.msra.mxu0 0
        %1382 = vmatprep.subr.bf16.mxu0 0
        %1383 = vmatpush1.bf16.msra.mxu0 0
        %1384 = vmatprep.subr.bf16.mxu0 0
        %1385 = vmatpush1.bf16.msra.mxu0 0
        %1386 = vmatprep.subr.bf16.mxu0 0
        %1387 = vmatpush1.bf16.msra.mxu0 0
        %1388 = vmatprep.subr.bf16.mxu0 0
        %1389 = vmatpush1.bf16.msra.mxu0 0
        %1390 = vmatprep.subr.bf16.mxu0 0
        %1391 = vmatpush1.bf16.msra.mxu0 0
        %1392 = vmatprep.subr.bf16.mxu0 0
        %1393 = vmatpush1.bf16.msra.mxu0 0
        %1394 = vmatprep.subr.bf16.mxu0 0
        %1395 = vmatpush1.bf16.msra.mxu0 0
        %1396 = vmatprep.subr.bf16.mxu0 0
        %1397 = vmatpush1.bf16.msra.mxu0 0
        %1398 = vmatprep.subr.bf16.mxu0 0
        %1399 = vmatpush1.bf16.msra.mxu0 0
        %1400 = vmatprep.mubr.bf16.mxu0 0
        %1401 = vmatmul.mubr.bf16.gmra.mrb[0].mxu0 %v1363
        %v1402 = vpop.f32.mrb[0].mxu0
        %v1403 = vadd.f32 0.0, %v1402
        %v1404 = vpop.f32.mrb[0].mxu0
        %v1405 = vpop.f32.mrb[0].mxu0
        %v1406 = vpop.f32.mrb[0].mxu0
        %1407 = vdwg.mxu0
        %v1409 = vsel %vm892, %v887, 0
        %v1412 = vsel %vm896, %v1269, 0
        %1414 = vmatprep.subr.bf16.mxu0 0
        %1415 = vmatpush1.bf16.msra.mxu0 %v1412
        %1416 = vmatprep.subr.bf16.mxu0 0
        %1417 = vmatpush1.bf16.msra.mxu0 0
        %1418 = vmatprep.subr.bf16.mxu0 0
        %1419 = vmatpush1.bf16.msra.mxu0 0
        %1420 = vmatprep.subr.bf16.mxu0 0
        %1421 = vmatpush1.bf16.msra.mxu0 0
        %1422 = vmatprep.subr.bf16.mxu0 0
        %1423 = vmatpush1.bf16.msra.mxu0 0
        %1424 = vmatprep.subr.bf16.mxu0 0
        %1425 = vmatpush1.bf16.msra.mxu0 0
        %1426 = vmatprep.subr.bf16.mxu0 0
        %1427 = vmatpush1.bf16.msra.mxu0 0
        %1428 = vmatprep.subr.bf16.mxu0 0
        %1429 = vmatpush1.bf16.msra.mxu0 0
        %1430 = vmatprep.subr.bf16.mxu0 0
        %1431 = vmatpush1.bf16.msra.mxu0 0
        %1432 = vmatprep.subr.bf16.mxu0 0
        %1433 = vmatpush1.bf16.msra.mxu0 0
        %1434 = vmatprep.subr.bf16.mxu0 0
        %1435 = vmatpush1.bf16.msra.mxu0 0
        %1436 = vmatprep.subr.bf16.mxu0 0
        %1437 = vmatpush1.bf16.msra.mxu0 0
        %1438 = vmatprep.subr.bf16.mxu0 0
        %1439 = vmatpush1.bf16.msra.mxu0 0
        %1440 = vmatprep.subr.bf16.mxu0 0
        %1441 = vmatpush1.bf16.msra.mxu0 0
        %1442 = vmatprep.subr.bf16.mxu0 0
        %1443 = vmatpush1.bf16.msra.mxu0 0
        %1444 = vmatprep.subr.bf16.mxu0 0
        %1445 = vmatpush1.bf16.msra.mxu0 0
        %1446 = vmatprep.mubr.bf16.mxu0 0
        %1447 = vmatmul.mubr.bf16.gmra.mrb[0].mxu0 %v1409
        %v1448 = vpop.f32.mrb[0].mxu0
        %v1449 = vadd.f32 0.0, %v1448
        %v1450 = vpop.f32.mrb[0].mxu0
        %v1451 = vpop.f32.mrb[0].mxu0
        %v1452 = vpop.f32.mrb[0].mxu0
        %1453 = vdwg.mxu0
        %v1454 = vpack.c.bf16 %v935, %v935
        %v1455 = vpack.c.bf16 %v981, %v981
        %v1456 = vpack.c.bf16 %v1027, %v1027
        %v1457 = vpack.c.bf16 %v1073, %v1073
        %v1458 = vpack.c.bf16 %v1123, %v1123
        %v1459 = vpack.c.bf16 %v1169, %v1169
        %v1460 = vpack.c.bf16 %v1215, %v1215
        %v1461 = vpack.c.bf16 %v1261, %v1261
        %v1463 = vsel %vm892, %v1454, 0
        %v1466 = vsel %vm892, %v1458, 0
        %1468 = vmatprep.subr.bf16.mxu0 0
        %1469 = vmatpush1.bf16.xpose.msra.mxu0 %v1466
        %1470 = vmatprep.subr.bf16.mxu0 0
        %1471 = vmatpush1.bf16.xpose.msra.mxu0 0
        %1472 = vmatprep.subr.bf16.mxu0 0
        %1473 = vmatpush1.bf16.xpose.msra.mxu0 0
        %1474 = vmatprep.subr.bf16.mxu0 0
        %1475 = vmatpush1.bf16.xpose.msra.mxu0 0
        %1476 = vmatprep.subr.bf16.mxu0 0
        %1477 = vmatpush1.bf16.xpose.msra.mxu0 0
        %1478 = vmatprep.subr.bf16.mxu0 0
        %1479 = vmatpush1.bf16.xpose.msra.mxu0 0
        %1480 = vmatprep.subr.bf16.mxu0 0
        %1481 = vmatpush1.bf16.xpose.msra.mxu0 0
        %1482 = vmatprep.subr.bf16.mxu0 0
        %1483 = vmatpush1.bf16.xpose.msra.mxu0 0
        %1484 = vmatprep.subr.bf16.mxu0 0
        %1485 = vmatpush1.bf16.xpose.msra.mxu0 0
        %1486 = vmatprep.subr.bf16.mxu0 0
        %1487 = vmatpush1.bf16.xpose.msra.mxu0 0
        %1488 = vmatprep.subr.bf16.mxu0 0
        %1489 = vmatpush1.bf16.xpose.msra.mxu0 0
        %1490 = vmatprep.subr.bf16.mxu0 0
        %1491 = vmatpush1.bf16.xpose.msra.mxu0 0
        %1492 = vmatprep.subr.bf16.mxu0 0
        %1493 = vmatpush1.bf16.xpose.msra.mxu0 0
        %1494 = vmatprep.subr.bf16.mxu0 0
        %1495 = vmatpush1.bf16.xpose.msra.mxu0 0
        %1496 = vmatprep.subr.bf16.mxu0 0
        %1497 = vmatpush1.bf16.xpose.msra.mxu0 0
        %1498 = vmatprep.subr.bf16.mxu0 0
        %1499 = vmatpush1.bf16.xpose.msra.mxu0 0
        %1500 = vmatprep.mubr.bf16.mxu0 0
        %1501 = vmatmul.mubr.bf16.gmra.mrb[0].mxu0 %v1463
        %v1502 = vpop.f32.mrb[0].mxu0
        %v1503 = vadd.f32 0.0, %v1502
        %v1504 = vpop.f32.mrb[0].mxu0
        %v1505 = vpop.f32.mrb[0].mxu0
        %v1506 = vpop.f32.mrb[0].mxu0
        %1507 = vdwg.mxu0
        %v1509 = vsel %vm892, %v1455, 0
        %v1512 = vsel %vm892, %v1459, 0
        %1514 = vmatprep.subr.bf16.mxu0 0
        %1515 = vmatpush1.bf16.xpose.msra.mxu0 %v1512
        %1516 = vmatprep.subr.bf16.mxu0 0
        %1517 = vmatpush1.bf16.xpose.msra.mxu0 0
        %1518 = vmatprep.subr.bf16.mxu0 0
        %1519 = vmatpush1.bf16.xpose.msra.mxu0 0
        %1520 = vmatprep.subr.bf16.mxu0 0
        %1521 = vmatpush1.bf16.xpose.msra.mxu0 0
        %1522 = vmatprep.subr.bf16.mxu0 0
        %1523 = vmatpush1.bf16.xpose.msra.mxu0 0
        %1524 = vmatprep.subr.bf16.mxu0 0
        %1525 = vmatpush1.bf16.xpose.msra.mxu0 0
        %1526 = vmatprep.subr.bf16.mxu0 0
        %1527 = vmatpush1.bf16.xpose.msra.mxu0 0
        %1528 = vmatprep.subr.bf16.mxu0 0
        %1529 = vmatpush1.bf16.xpose.msra.mxu0 0
        %1530 = vmatprep.subr.bf16.mxu0 0
        %1531 = vmatpush1.bf16.xpose.msra.mxu0 0
        %1532 = vmatprep.subr.bf16.mxu0 0
        %1533 = vmatpush1.bf16.xpose.msra.mxu0 0
        %1534 = vmatprep.subr.bf16.mxu0 0
        %1535 = vmatpush1.bf16.xpose.msra.mxu0 0
        %1536 = vmatprep.subr.bf16.mxu0 0
        %1537 = vmatpush1.bf16.xpose.msra.mxu0 0
        %1538 = vmatprep.subr.bf16.mxu0 0
        %1539 = vmatpush1.bf16.xpose.msra.mxu0 0
        %1540 = vmatprep.subr.bf16.mxu0 0
        %1541 = vmatpush1.bf16.xpose.msra.mxu0 0
        %1542 = vmatprep.subr.bf16.mxu0 0
        %1543 = vmatpush1.bf16.xpose.msra.mxu0 0
        %1544 = vmatprep.subr.bf16.mxu0 0
        %1545 = vmatpush1.bf16.xpose.msra.mxu0 0
        %1546 = vmatprep.mubr.bf16.mxu0 0
        %1547 = vmatmul.mubr.bf16.gmra.mrb[0].mxu0 %v1509
        %v1548 = vpop.f32.mrb[0].mxu0
        %v1549 = vadd.f32 0.0, %v1548
        %v1550 = vpop.f32.mrb[0].mxu0
        %v1551 = vpop.f32.mrb[0].mxu0
        %v1552 = vpop.f32.mrb[0].mxu0
        %1553 = vdwg.mxu0
        %v1555 = vsel %vm892, %v1456, 0
        %v1558 = vsel %vm892, %v1460, 0
        %1560 = vmatprep.subr.bf16.mxu0 0
        %1561 = vmatpush1.bf16.xpose.msra.mxu0 %v1558
        %1562 = vmatprep.subr.bf16.mxu0 0
        %1563 = vmatpush1.bf16.xpose.msra.mxu0 0
        %1564 = vmatprep.subr.bf16.mxu0 0
        %1565 = vmatpush1.bf16.xpose.msra.mxu0 0
        %1566 = vmatprep.subr.bf16.mxu0 0
        %1567 = vmatpush1.bf16.xpose.msra.mxu0 0
        %1568 = vmatprep.subr.bf16.mxu0 0
        %1569 = vmatpush1.bf16.xpose.msra.mxu0 0
        %1570 = vmatprep.subr.bf16.mxu0 0
        %1571 = vmatpush1.bf16.xpose.msra.mxu0 0
        %1572 = vmatprep.subr.bf16.mxu0 0
        %1573 = vmatpush1.bf16.xpose.msra.mxu0 0
        %1574 = vmatprep.subr.bf16.mxu0 0
        %1575 = vmatpush1.bf16.xpose.msra.mxu0 0
        %1576 = vmatprep.subr.bf16.mxu0 0
        %1577 = vmatpush1.bf16.xpose.msra.mxu0 0
        %1578 = vmatprep.subr.bf16.mxu0 0
        %1579 = vmatpush1.bf16.xpose.msra.mxu0 0
        %1580 = vmatprep.subr.bf16.mxu0 0
        %1581 = vmatpush1.bf16.xpose.msra.mxu0 0
        %1582 = vmatprep.subr.bf16.mxu0 0
        %1583 = vmatpush1.bf16.xpose.msra.mxu0 0
        %1584 = vmatprep.subr.bf16.mxu0 0
        %1585 = vmatpush1.bf16.xpose.msra.mxu0 0
        %1586 = vmatprep.subr.bf16.mxu0 0
        %1587 = vmatpush1.bf16.xpose.msra.mxu0 0
        %1588 = vmatprep.subr.bf16.mxu0 0
        %1589 = vmatpush1.bf16.xpose.msra.mxu0 0
        %1590 = vmatprep.subr.bf16.mxu0 0
        %1591 = vmatpush1.bf16.xpose.msra.mxu0 0
        %1592 = vmatprep.mubr.bf16.mxu0 0
        %1593 = vmatmul.mubr.bf16.gmra.mrb[0].mxu0 %v1555
        %v1594 = vpop.f32.mrb[0].mxu0
        %v1595 = vadd.f32 0.0, %v1594
        %v1596 = vpop.f32.mrb[0].mxu0
        %v1597 = vpop.f32.mrb[0].mxu0
        %v1598 = vpop.f32.mrb[0].mxu0
        %1599 = vdwg.mxu0
        %v1601 = vsel %vm892, %v1457, 0
        %v1604 = vsel %vm892, %v1461, 0
        %1606 = vmatprep.subr.bf16.mxu0 0
        %1607 = vmatpush1.bf16.xpose.msra.mxu0 %v1604
        %1608 = vmatprep.subr.bf16.mxu0 0
        %1609 = vmatpush1.bf16.xpose.msra.mxu0 0
        %1610 = vmatprep.subr.bf16.mxu0 0
        %1611 = vmatpush1.bf16.xpose.msra.mxu0 0
        %1612 = vmatprep.subr.bf16.mxu0 0
        %1613 = vmatpush1.bf16.xpose.msra.mxu0 0
        %1614 = vmatprep.subr.bf16.mxu0 0
        %1615 = vmatpush1.bf16.xpose.msra.mxu0 0
        %1616 = vmatprep.subr.bf16.mxu0 0
        %1617 = vmatpush1.bf16.xpose.msra.mxu0 0
        %1618 = vmatprep.subr.bf16.mxu0 0
        %1619 = vmatpush1.bf16.xpose.msra.mxu0 0
        %1620 = vmatprep.subr.bf16.mxu0 0
        %1621 = vmatpush1.bf16.xpose.msra.mxu0 0
        %1622 = vmatprep.subr.bf16.mxu0 0
        %1623 = vmatpush1.bf16.xpose.msra.mxu0 0
        %1624 = vmatprep.subr.bf16.mxu0 0
        %1625 = vmatpush1.bf16.xpose.msra.mxu0 0
        %1626 = vmatprep.subr.bf16.mxu0 0
        %1627 = vmatpush1.bf16.xpose.msra.mxu0 0
        %1628 = vmatprep.subr.bf16.mxu0 0
        %1629 = vmatpush1.bf16.xpose.msra.mxu0 0
        %1630 = vmatprep.subr.bf16.mxu0 0
        %1631 = vmatpush1.bf16.xpose.msra.mxu0 0
        %1632 = vmatprep.subr.bf16.mxu0 0
        %1633 = vmatpush1.bf16.xpose.msra.mxu0 0
        %1634 = vmatprep.subr.bf16.mxu0 0
        %1635 = vmatpush1.bf16.xpose.msra.mxu0 0
        %1636 = vmatprep.subr.bf16.mxu0 0
        %1637 = vmatpush1.bf16.xpose.msra.mxu0 0
        %1638 = vmatprep.mubr.bf16.mxu0 0
        %1639 = vmatmul.mubr.bf16.gmra.mrb[0].mxu0 %v1601
        %v1640 = vpop.f32.mrb[0].mxu0
        %v1641 = vadd.f32 0.0, %v1640
        %v1642 = vpop.f32.mrb[0].mxu0
        %v1643 = vpop.f32.mrb[0].mxu0
        %v1644 = vpop.f32.mrb[0].mxu0
        %1645 = vdwg.mxu0
        %v1646 = vsel %vm892, %v1503, -inf
        %1647 = vmax.xlane.f32.xlu0 %v1646
        %v1648 = vpop.xlane.xlu0 %1647
        %v1649 = vsel %vm892, %v1549, -inf
        %1650 = vmax.xlane.f32.xlu0 %v1649
        %v1651 = vpop.xlane.xlu0 %1650
        %v1652 = vsel %vm892, %v1595, -inf
        %1653 = vmax.xlane.f32.xlu0 %v1652
        %v1654 = vpop.xlane.xlu0 %1653
        %v1655 = vsel %vm892, %v1641, -inf
        %1656 = vmax.xlane.f32.xlu0 %v1655
        %v1657 = vpop.xlane.xlu0 %1656
        %v1658 = vsub.f32 %v1503, %v1648
        %v1659 = vsub.f32 %v1549, %v1651
        %v1660 = vsub.f32 %v1595, %v1654
        %v1661 = vsub.f32 %v1641, %v1657
        %v1662 = vmul.f32 %v1658, 1.442695
        %v1663 = vpow.pop %v1662
        %v1664 = vmul.f32 %v1659, 1.442695
        %v1665 = vpow.pop %v1664
        %v1666 = vmul.f32 %v1660, 1.442695
        %v1667 = vpow.pop %v1666
        %v1668 = vmul.f32 %v1661, 1.442695
        %v1669 = vpow.pop %v1668
        %v1670 = vsel %vm892, %v1663, 0.0
        %1671 = vadd.xlane.f32.xlu0 %v1670
        %v1672 = vpop.xlane.xlu0 %1671
        %v1673 = vsel %vm892, %v1665, 0.0
        %1674 = vadd.xlane.f32.xlu0 %v1673
        %v1675 = vpop.xlane.xlu0 %1674
        %v1676 = vsel %vm892, %v1667, 0.0
        %1677 = vadd.xlane.f32.xlu0 %v1676
        %v1678 = vpop.xlane.xlu0 %1677
        %v1679 = vsel %vm892, %v1669, 0.0
        %1680 = vadd.xlane.f32.xlu0 %v1679
        %v1681 = vpop.xlane.xlu0 %1680
        %v1682 = vrcp.pop %v1672
        %v1683 = vrcp.pop %v1675
        %v1684 = vrcp.pop %v1678
        %v1685 = vrcp.pop %v1681
        %v1686 = vmul.f32 %v1663, %v1682
        %v1687 = vmul.f32 %v1665, %v1683
        %v1688 = vmul.f32 %v1667, %v1684
        %v1689 = vmul.f32 %v1669, %v1685
        %v1690 = vpack.c.bf16 %v1686, %v1686
        %v1691 = vpack.c.bf16 %v1687, %v1687
        %v1692 = vpack.c.bf16 %v1688, %v1688
        %v1693 = vpack.c.bf16 %v1689, %v1689
        %v1694 = vpack.c.bf16 %v1311, %v1311
        %v1695 = vpack.c.bf16 %v1357, %v1357
        %v1696 = vpack.c.bf16 %v1403, %v1403
        %v1697 = vpack.c.bf16 %v1449, %v1449
        %v1699 = vsel %vm892, %v1690, 0
        %v1702 = vsel %vm896, %v1694, 0
        %1704 = vmatprep.subr.bf16.mxu0 0
        %1705 = vmatpush1.bf16.msra.mxu0 %v1702
        %1706 = vmatprep.subr.bf16.mxu0 0
        %1707 = vmatpush1.bf16.msra.mxu0 0
        %1708 = vmatprep.subr.bf16.mxu0 0
        %1709 = vmatpush1.bf16.msra.mxu0 0
        %1710 = vmatprep.subr.bf16.mxu0 0
        %1711 = vmatpush1.bf16.msra.mxu0 0
        %1712 = vmatprep.subr.bf16.mxu0 0
        %1713 = vmatpush1.bf16.msra.mxu0 0
        %1714 = vmatprep.subr.bf16.mxu0 0
        %1715 = vmatpush1.bf16.msra.mxu0 0
        %1716 = vmatprep.subr.bf16.mxu0 0
        %1717 = vmatpush1.bf16.msra.mxu0 0
        %1718 = vmatprep.subr.bf16.mxu0 0
        %1719 = vmatpush1.bf16.msra.mxu0 0
        %1720 = vmatprep.subr.bf16.mxu0 0
        %1721 = vmatpush1.bf16.msra.mxu0 0
        %1722 = vmatprep.subr.bf16.mxu0 0
        %1723 = vmatpush1.bf16.msra.mxu0 0
        %1724 = vmatprep.subr.bf16.mxu0 0
        %1725 = vmatpush1.bf16.msra.mxu0 0
        %1726 = vmatprep.subr.bf16.mxu0 0
        %1727 = vmatpush1.bf16.msra.mxu0 0
        %1728 = vmatprep.subr.bf16.mxu0 0
        %1729 = vmatpush1.bf16.msra.mxu0 0
        %1730 = vmatprep.subr.bf16.mxu0 0
        %1731 = vmatpush1.bf16.msra.mxu0 0
        %1732 = vmatprep.subr.bf16.mxu0 0
        %1733 = vmatpush1.bf16.msra.mxu0 0
        %1734 = vmatprep.subr.bf16.mxu0 0
        %1735 = vmatpush1.bf16.msra.mxu0 0
        %1736 = vmatprep.mubr.bf16.mxu0 0
        %1737 = vmatmul.mubr.bf16.gmra.mrb[0].mxu0 %v1699
        %v1738 = vpop.f32.mrb[0].mxu0
        %v1739 = vadd.f32 0.0, %v1738
        %v1740 = vpop.f32.mrb[0].mxu0
        %v1741 = vpop.f32.mrb[0].mxu0
        %v1742 = vpop.f32.mrb[0].mxu0
        %1743 = vdwg.mxu0
        %v1745 = vsel %vm892, %v1691, 0
        %v1748 = vsel %vm896, %v1695, 0
        %1750 = vmatprep.subr.bf16.mxu0 0
        %1751 = vmatpush1.bf16.msra.mxu0 %v1748
        %1752 = vmatprep.subr.bf16.mxu0 0
        %1753 = vmatpush1.bf16.msra.mxu0 0
        %1754 = vmatprep.subr.bf16.mxu0 0
        %1755 = vmatpush1.bf16.msra.mxu0 0
        %1756 = vmatprep.subr.bf16.mxu0 0
        %1757 = vmatpush1.bf16.msra.mxu0 0
        %1758 = vmatprep.subr.bf16.mxu0 0
        %1759 = vmatpush1.bf16.msra.mxu0 0
        %1760 = vmatprep.subr.bf16.mxu0 0
        %1761 = vmatpush1.bf16.msra.mxu0 0
        %1762 = vmatprep.subr.bf16.mxu0 0
        %1763 = vmatpush1.bf16.msra.mxu0 0
        %1764 = vmatprep.subr.bf16.mxu0 0
        %1765 = vmatpush1.bf16.msra.mxu0 0
        %1766 = vmatprep.subr.bf16.mxu0 0
        %1767 = vmatpush1.bf16.msra.mxu0 0
        %1768 = vmatprep.subr.bf16.mxu0 0
        %1769 = vmatpush1.bf16.msra.mxu0 0
        %1770 = vmatprep.subr.bf16.mxu0 0
        %1771 = vmatpush1.bf16.msra.mxu0 0
        %1772 = vmatprep.subr.bf16.mxu0 0
        %1773 = vmatpush1.bf16.msra.mxu0 0
        %1774 = vmatprep.subr.bf16.mxu0 0
        %1775 = vmatpush1.bf16.msra.mxu0 0
        %1776 = vmatprep.subr.bf16.mxu0 0
        %1777 = vmatpush1.bf16.msra.mxu0 0
        %1778 = vmatprep.subr.bf16.mxu0 0
        %1779 = vmatpush1.bf16.msra.mxu0 0
        %1780 = vmatprep.subr.bf16.mxu0 0
        %1781 = vmatpush1.bf16.msra.mxu0 0
        %1782 = vmatprep.mubr.bf16.mxu0 0
        %1783 = vmatmul.mubr.bf16.gmra.mrb[0].mxu0 %v1745
        %v1784 = vpop.f32.mrb[0].mxu0
        %v1785 = vadd.f32 0.0, %v1784
        %v1786 = vpop.f32.mrb[0].mxu0
        %v1787 = vpop.f32.mrb[0].mxu0
        %v1788 = vpop.f32.mrb[0].mxu0
        %1789 = vdwg.mxu0
        %v1791 = vsel %vm892, %v1692, 0
        %v1794 = vsel %vm896, %v1696, 0
        %1796 = vmatprep.subr.bf16.mxu0 0
        %1797 = vmatpush1.bf16.msra.mxu0 %v1794
        %1798 = vmatprep.subr.bf16.mxu0 0
        %1799 = vmatpush1.bf16.msra.mxu0 0
        %1800 = vmatprep.subr.bf16.mxu0 0
        %1801 = vmatpush1.bf16.msra.mxu0 0
        %1802 = vmatprep.subr.bf16.mxu0 0
        %1803 = vmatpush1.bf16.msra.mxu0 0
        %1804 = vmatprep.subr.bf16.mxu0 0
        %1805 = vmatpush1.bf16.msra.mxu0 0
        %1806 = vmatprep.subr.bf16.mxu0 0
        %1807 = vmatpush1.bf16.msra.mxu0 0
        %1808 = vmatprep.subr.bf16.mxu0 0
        %1809 = vmatpush1.bf16.msra.mxu0 0
        %1810 = vmatprep.subr.bf16.mxu0 0
        %1811 = vmatpush1.bf16.msra.mxu0 0
        %1812 = vmatprep.subr.bf16.mxu0 0
        %1813 = vmatpush1.bf16.msra.mxu0 0
        %1814 = vmatprep.subr.bf16.mxu0 0
        %1815 = vmatpush1.bf16.msra.mxu0 0
        %1816 = vmatprep.subr.bf16.mxu0 0
        %1817 = vmatpush1.bf16.msra.mxu0 0
        %1818 = vmatprep.subr.bf16.mxu0 0
        %1819 = vmatpush1.bf16.msra.mxu0 0
        %1820 = vmatprep.subr.bf16.mxu0 0
        %1821 = vmatpush1.bf16.msra.mxu0 0
        %1822 = vmatprep.subr.bf16.mxu0 0
        %1823 = vmatpush1.bf16.msra.mxu0 0
        %1824 = vmatprep.subr.bf16.mxu0 0
        %1825 = vmatpush1.bf16.msra.mxu0 0
        %1826 = vmatprep.subr.bf16.mxu0 0
        %1827 = vmatpush1.bf16.msra.mxu0 0
        %1828 = vmatprep.mubr.bf16.mxu0 0
        %1829 = vmatmul.mubr.bf16.gmra.mrb[0].mxu0 %v1791
        %v1830 = vpop.f32.mrb[0].mxu0
        %v1831 = vadd.f32 0.0, %v1830
        %v1832 = vpop.f32.mrb[0].mxu0
        %v1833 = vpop.f32.mrb[0].mxu0
        %v1834 = vpop.f32.mrb[0].mxu0
        %1835 = vdwg.mxu0
        %v1837 = vsel %vm892, %v1693, 0
        %v1840 = vsel %vm896, %v1697, 0
        %1842 = vmatprep.subr.bf16.mxu0 0
        %1843 = vmatpush1.bf16.msra.mxu0 %v1840
        %1844 = vmatprep.subr.bf16.mxu0 0
        %1845 = vmatpush1.bf16.msra.mxu0 0
        %1846 = vmatprep.subr.bf16.mxu0 0
        %1847 = vmatpush1.bf16.msra.mxu0 0
        %1848 = vmatprep.subr.bf16.mxu0 0
        %1849 = vmatpush1.bf16.msra.mxu0 0
        %1850 = vmatprep.subr.bf16.mxu0 0
        %1851 = vmatpush1.bf16.msra.mxu0 0
        %1852 = vmatprep.subr.bf16.mxu0 0
        %1853 = vmatpush1.bf16.msra.mxu0 0
        %1854 = vmatprep.subr.bf16.mxu0 0
        %1855 = vmatpush1.bf16.msra.mxu0 0
        %1856 = vmatprep.subr.bf16.mxu0 0
        %1857 = vmatpush1.bf16.msra.mxu0 0
        %1858 = vmatprep.subr.bf16.mxu0 0
        %1859 = vmatpush1.bf16.msra.mxu0 0
        %1860 = vmatprep.subr.bf16.mxu0 0
        %1861 = vmatpush1.bf16.msra.mxu0 0
        %1862 = vmatprep.subr.bf16.mxu0 0
        %1863 = vmatpush1.bf16.msra.mxu0 0
        %1864 = vmatprep.subr.bf16.mxu0 0
        %1865 = vmatpush1.bf16.msra.mxu0 0
        %1866 = vmatprep.subr.bf16.mxu0 0
        %1867 = vmatpush1.bf16.msra.mxu0 0
        %1868 = vmatprep.subr.bf16.mxu0 0
        %1869 = vmatpush1.bf16.msra.mxu0 0
        %1870 = vmatprep.subr.bf16.mxu0 0
        %1871 = vmatpush1.bf16.msra.mxu0 0
        %1872 = vmatprep.subr.bf16.mxu0 0
        %1873 = vmatpush1.bf16.msra.mxu0 0
        %1874 = vmatprep.mubr.bf16.mxu0 0
        %1875 = vmatmul.mubr.bf16.gmra.mrb[0].mxu0 %v1837
        %v1876 = vpop.f32.mrb[0].mxu0
        %v1877 = vadd.f32 0.0, %v1876
        %v1878 = vpop.f32.mrb[0].mxu0
        %v1879 = vpop.f32.mrb[0].mxu0
        %v1880 = vpop.f32.mrb[0].mxu0
        %1881 = vdwg.mxu0
        %v1882 = vpack.c.bf16 %v1739, %v1739
        %v1883 = vpack.c.bf16 %v1785, %v1785
        %v1884 = vpack.c.bf16 %v1831, %v1831
        %v1885 = vpack.c.bf16 %v1877, %v1877
        %v1886 = vld [vmem:[#allocation14] sm:$0xf]
        %v1887 = vld [vmem:[#allocation14 + $0x4] sm:$0xf]
        %v1888 = vld [vmem:[#allocation14 + $0x8] sm:$0xf]
        %v1889 = vld [vmem:[#allocation14 + $0xc] sm:$0xf]
        %v1891 = vsel %vm892, %v1882, 0
        %v1894 = vsel %vm896, %v1886, 0
        %1896 = vmatprep.subr.bf16.mxu0 0
        %1897 = vmatpush1.bf16.msra.mxu0 %v1894
        %1898 = vmatprep.subr.bf16.mxu0 0
        %1899 = vmatpush1.bf16.msra.mxu0 0
        %1900 = vmatprep.subr.bf16.mxu0 0
        %1901 = vmatpush1.bf16.msra.mxu0 0
        %1902 = vmatprep.subr.bf16.mxu0 0
        %1903 = vmatpush1.bf16.msra.mxu0 0
        %1904 = vmatprep.subr.bf16.mxu0 0
        %1905 = vmatpush1.bf16.msra.mxu0 0
        %1906 = vmatprep.subr.bf16.mxu0 0
        %1907 = vmatpush1.bf16.msra.mxu0 0
        %1908 = vmatprep.subr.bf16.mxu0 0
        %1909 = vmatpush1.bf16.msra.mxu0 0
        %1910 = vmatprep.subr.bf16.mxu0 0
        %1911 = vmatpush1.bf16.msra.mxu0 0
        %1912 = vmatprep.subr.bf16.mxu0 0
        %1913 = vmatpush1.bf16.msra.mxu0 0
        %1914 = vmatprep.subr.bf16.mxu0 0
        %1915 = vmatpush1.bf16.msra.mxu0 0
        %1916 = vmatprep.subr.bf16.mxu0 0
        %1917 = vmatpush1.bf16.msra.mxu0 0
        %1918 = vmatprep.subr.bf16.mxu0 0
        %1919 = vmatpush1.bf16.msra.mxu0 0
        %1920 = vmatprep.subr.bf16.mxu0 0
        %1921 = vmatpush1.bf16.msra.mxu0 0
        %1922 = vmatprep.subr.bf16.mxu0 0
        %1923 = vmatpush1.bf16.msra.mxu0 0
        %1924 = vmatprep.subr.bf16.mxu0 0
        %1925 = vmatpush1.bf16.msra.mxu0 0
        %1926 = vmatprep.subr.bf16.mxu0 0
        %1927 = vmatpush1.bf16.msra.mxu0 0
        %1928 = vmatprep.mubr.bf16.mxu0 0
        %1929 = vmatmul.mubr.bf16.gmra.mrb[0].mxu0 %v1891
        %v1930 = vpop.f32.mrb[0].mxu0
        %v1931 = vadd.f32 0.0, %v1930
        %v1932 = vpop.f32.mrb[0].mxu0
        %v1933 = vpop.f32.mrb[0].mxu0
        %v1934 = vpop.f32.mrb[0].mxu0
        %1935 = vdwg.mxu0
        %v1937 = vsel %vm892, %v1883, 0
        %v1940 = vsel %vm896, %v1887, 0
        %1942 = vmatprep.subr.bf16.mxu0 0
        %1943 = vmatpush1.bf16.msra.mxu0 %v1940
        %1944 = vmatprep.subr.bf16.mxu0 0
        %1945 = vmatpush1.bf16.msra.mxu0 0
        %1946 = vmatprep.subr.bf16.mxu0 0
        %1947 = vmatpush1.bf16.msra.mxu0 0
        %1948 = vmatprep.subr.bf16.mxu0 0
        %1949 = vmatpush1.bf16.msra.mxu0 0
        %1950 = vmatprep.subr.bf16.mxu0 0
        %1951 = vmatpush1.bf16.msra.mxu0 0
        %1952 = vmatprep.subr.bf16.mxu0 0
        %1953 = vmatpush1.bf16.msra.mxu0 0
        %1954 = vmatprep.subr.bf16.mxu0 0
        %1955 = vmatpush1.bf16.msra.mxu0 0
        %1956 = vmatprep.subr.bf16.mxu0 0
        %1957 = vmatpush1.bf16.msra.mxu0 0
        %1958 = vmatprep.subr.bf16.mxu0 0
        %1959 = vmatpush1.bf16.msra.mxu0 0
        %1960 = vmatprep.subr.bf16.mxu0 0
        %1961 = vmatpush1.bf16.msra.mxu0 0
        %1962 = vmatprep.subr.bf16.mxu0 0
        %1963 = vmatpush1.bf16.msra.mxu0 0
        %1964 = vmatprep.subr.bf16.mxu0 0
        %1965 = vmatpush1.bf16.msra.mxu0 0
        %1966 = vmatprep.subr.bf16.mxu0 0
        %1967 = vmatpush1.bf16.msra.mxu0 0
        %1968 = vmatprep.subr.bf16.mxu0 0
        %1969 = vmatpush1.bf16.msra.mxu0 0
        %1970 = vmatprep.subr.bf16.mxu0 0
        %1971 = vmatpush1.bf16.msra.mxu0 0
        %1972 = vmatprep.subr.bf16.mxu0 0
        %1973 = vmatpush1.bf16.msra.mxu0 0
        %1974 = vmatprep.mubr.bf16.mxu0 0
        %1975 = vmatmul.mubr.bf16.gmra.mrb[0].mxu0 %v1937
        %v1976 = vpop.f32.mrb[0].mxu0
        %v1977 = vadd.f32 0.0, %v1976
        %v1978 = vpop.f32.mrb[0].mxu0
        %v1979 = vpop.f32.mrb[0].mxu0
        %v1980 = vpop.f32.mrb[0].mxu0
        %1981 = vdwg.mxu0
        %v1983 = vsel %vm892, %v1884, 0
        %v1986 = vsel %vm896, %v1888, 0
        %1988 = vmatprep.subr.bf16.mxu0 0
        %1989 = vmatpush1.bf16.msra.mxu0 %v1986
        %1990 = vmatprep.subr.bf16.mxu0 0
        %1991 = vmatpush1.bf16.msra.mxu0 0
        %1992 = vmatprep.subr.bf16.mxu0 0
        %1993 = vmatpush1.bf16.msra.mxu0 0
        %1994 = vmatprep.subr.bf16.mxu0 0
        %1995 = vmatpush1.bf16.msra.mxu0 0
        %1996 = vmatprep.subr.bf16.mxu0 0
        %1997 = vmatpush1.bf16.msra.mxu0 0
        %1998 = vmatprep.subr.bf16.mxu0 0
        %1999 = vmatpush1.bf16.msra.mxu0 0
        %2000 = vmatprep.subr.bf16.mxu0 0
        %2001 = vmatpush1.bf16.msra.mxu0 0
        %2002 = vmatprep.subr.bf16.mxu0 0
        %2003 = vmatpush1.bf16.msra.mxu0 0
        %2004 = vmatprep.subr.bf16.mxu0 0
        %2005 = vmatpush1.bf16.msra.mxu0 0
        %2006 = vmatprep.subr.bf16.mxu0 0
        %2007 = vmatpush1.bf16.msra.mxu0 0
        %2008 = vmatprep.subr.bf16.mxu0 0
        %2009 = vmatpush1.bf16.msra.mxu0 0
        %2010 = vmatprep.subr.bf16.mxu0 0
        %2011 = vmatpush1.bf16.msra.mxu0 0
        %2012 = vmatprep.subr.bf16.mxu0 0
        %2013 = vmatpush1.bf16.msra.mxu0 0
        %2014 = vmatprep.subr.bf16.mxu0 0
        %2015 = vmatpush1.bf16.msra.mxu0 0
        %2016 = vmatprep.subr.bf16.mxu0 0
        %2017 = vmatpush1.bf16.msra.mxu0 0
        %2018 = vmatprep.subr.bf16.mxu0 0
        %2019 = vmatpush1.bf16.msra.mxu0 0
        %2020 = vmatprep.mubr.bf16.mxu0 0
        %2021 = vmatmul.mubr.bf16.gmra.mrb[0].mxu0 %v1983
        %v2022 = vpop.f32.mrb[0].mxu0
        %v2023 = vadd.f32 0.0, %v2022
        %v2024 = vpop.f32.mrb[0].mxu0
        %v2025 = vpop.f32.mrb[0].mxu0
        %v2026 = vpop.f32.mrb[0].mxu0
        %2027 = vdwg.mxu0
        %v2029 = vsel %vm892, %v1885, 0
        %v2032 = vsel %vm896, %v1889, 0
        %2034 = vmatprep.subr.bf16.mxu0 0
        %2035 = vmatpush1.bf16.msra.mxu0 %v2032
        %2036 = vmatprep.subr.bf16.mxu0 0
        %2037 = vmatpush1.bf16.msra.mxu0 0
        %2038 = vmatprep.subr.bf16.mxu0 0
        %2039 = vmatpush1.bf16.msra.mxu0 0
        %2040 = vmatprep.subr.bf16.mxu0 0
        %2041 = vmatpush1.bf16.msra.mxu0 0
        %2042 = vmatprep.subr.bf16.mxu0 0
        %2043 = vmatpush1.bf16.msra.mxu0 0
        %2044 = vmatprep.subr.bf16.mxu0 0
        %2045 = vmatpush1.bf16.msra.mxu0 0
        %2046 = vmatprep.subr.bf16.mxu0 0
        %2047 = vmatpush1.bf16.msra.mxu0 0
        %2048 = vmatprep.subr.bf16.mxu0 0
        %2049 = vmatpush1.bf16.msra.mxu0 0
        %2050 = vmatprep.subr.bf16.mxu0 0
        %2051 = vmatpush1.bf16.msra.mxu0 0
        %2052 = vmatprep.subr.bf16.mxu0 0
        %2053 = vmatpush1.bf16.msra.mxu0 0
        %2054 = vmatprep.subr.bf16.mxu0 0
        %2055 = vmatpush1.bf16.msra.mxu0 0
        %2056 = vmatprep.subr.bf16.mxu0 0
        %2057 = vmatpush1.bf16.msra.mxu0 0
        %2058 = vmatprep.subr.bf16.mxu0 0
        %2059 = vmatpush1.bf16.msra.mxu0 0
        %2060 = vmatprep.subr.bf16.mxu0 0
        %2061 = vmatpush1.bf16.msra.mxu0 0
        %2062 = vmatprep.subr.bf16.mxu0 0
        %2063 = vmatpush1.bf16.msra.mxu0 0
        %2064 = vmatprep.subr.bf16.mxu0 0
        %2065 = vmatpush1.bf16.msra.mxu0 0
        %2066 = vmatprep.mubr.bf16.mxu0 0
        %2067 = vmatmul.mubr.bf16.gmra.mrb[0].mxu0 %v2029
        %v2068 = vpop.f32.mrb[0].mxu0
        %v2069 = vadd.f32 0.0, %v2068
        %v2070 = vpop.f32.mrb[0].mxu0
        %v2071 = vpop.f32.mrb[0].mxu0
        %v2072 = vpop.f32.mrb[0].mxu0
        %2073 = vdwg.mxu0
        %vm2074 = vcmask 261120
        %v2075 = vsel %vm2074, %v1931, 0.0
        %v2076 = vsel %vm2074, %v1977, 0.0
        %v2077 = vadd.f32 %v2075, %v2076
        %v2078 = vsel %vm2074, %v2023, 0.0
        %v2079 = vadd.f32 %v2077, %v2078
        %v2080 = vsel %vm2074, %v2069, 0.0
        %v2081 = vadd.f32 %v2079, %v2080
        %v2082 = vld [vmem:[#allocation16] sm:$0x1]
        %v2084 = vlaneseq
        %v2085 = vshrl.u32 %v2084, 7
        %v2086 = vsub.s32 0, %v2085
        %v2087 = vrot.slane %v2082, %v2086
        %v2089 = vadd.f32 %v2081, %v2087
        %v2090 = vld [vmem:[%s757] sm:$0xff]
        %v2091 = vadd.f32 %v2089, %v2090
        %v2092 = vld [vmem:[#allocation17] sm:$0x1]
        %v2093 = vld [vmem:[#allocation19] sm:$0x1]
        %v2094 = vsel %vm2074, %v2091, 0.0
        %2095 = vadd.xlane.f32.xlu0 %v2094
        %v2096 = vpop.xlane.xlu0 %2095
        %v2097 = vrcp.pop 32.0
        %v2098 = vmul.f32 %v2096, %v2097
        %v2099 = vsub.f32 %v2091, %v2098
        %v2100 = vmul.f32 %v2099, %v2099
        %v2101 = vsel %vm2074, %v2100, 0.0
        %2102 = vadd.xlane.f32.xlu0 %v2101
        %v2103 = vpop.xlane.xlu0 %2102
        %v2104 = vmul.f32 %v2103, %v2097
        %v2105 = vadd.f32 %v2104, 1e-05
        %v2106 = vrsqrt.pop %v2105
        %v2107 = vmul.f32 %v2099, %v2106
        %v2109 = vlaneseq
        %v2110 = vshrl.u32 %v2109, 7
        %v2111 = vsub.s32 0, %v2110
        %v2112 = vrot.slane %v2092, %v2111
        %v2114 = vmul.f32 %v2107, %v2112
        %v2116 = vlaneseq
        %v2117 = vshrl.u32 %v2116, 7
        %v2118 = vsub.s32 0, %v2117
        %v2119 = vrot.slane %v2093, %v2118
        %v2121 = vadd.f32 %v2114, %v2119
        %v2122 = vpack.c.bf16 %v2121, %v2121
        %v2123 = vld [vmem:[#allocation20] sm:$0xf]
        %v2124 = vld [vmem:[#allocation20 + $0x4] sm:$0xf]
        %v2125 = vld [vmem:[#allocation20 + $0x8] sm:$0xf]
        %v2126 = vld [vmem:[#allocation20 + $0xc] sm:$0xf]
        %v2127 = vld [vmem:[#allocation22] sm:$0x1]
        %v2129 = vlaneseq
        %v2130 = vshrl.u32 %v2129, 7
        %v2131 = vsub.s32 0, %v2130
        %v2132 = vrot.slane %v2127, %v2131
        %v2138 = vunpack.c.l.b16 %v2123
        %v2139 = vunpack.c.l.b16 %v2124
        %v2140 = vunpack.c.l.b16 %v2125
        %v2141 = vunpack.c.l.b16 %v2126
        %v2142 = vpack.c.b16 %v2139, %v2138
        %v2143 = vpack.c.b16 %v2141, %v2140
        %v2147 = vsel %vm2074, %v2122, 0
        %2149 = vmatprep.subr.bf16.mxu0 0
        %2150 = vmatpush1.bf16.msra.mxu0 %v2142
        %2151 = vmatprep.subr.bf16.mxu0 0
        %2152 = vmatpush1.bf16.msra.mxu0 %v2143
        %2153 = vmatprep.subr.bf16.mxu0 0
        %2154 = vmatpush1.bf16.msra.mxu0 0
        %2155 = vmatprep.subr.bf16.mxu0 0
        %2156 = vmatpush1.bf16.msra.mxu0 0
        %2157 = vmatprep.subr.bf16.mxu0 0
        %2158 = vmatpush1.bf16.msra.mxu0 0
        %2159 = vmatprep.subr.bf16.mxu0 0
        %2160 = vmatpush1.bf16.msra.mxu0 0
        %2161 = vmatprep.subr.bf16.mxu0 0
        %2162 = vmatpush1.bf16.msra.mxu0 0
        %2163 = vmatprep.subr.bf16.mxu0 0
        %2164 = vmatpush1.bf16.msra.mxu0 0
        %2165 = vmatprep.subr.bf16.mxu0 0
        %2166 = vmatpush1.bf16.msra.mxu0 0
        %2167 = vmatprep.subr.bf16.mxu0 0
        %2168 = vmatpush1.bf16.msra.mxu0 0
        %2169 = vmatprep.subr.bf16.mxu0 0
        %2170 = vmatpush1.bf16.msra.mxu0 0
        %2171 = vmatprep.subr.bf16.mxu0 0
        %2172 = vmatpush1.bf16.msra.mxu0 0
        %2173 = vmatprep.subr.bf16.mxu0 0
        %2174 = vmatpush1.bf16.msra.mxu0 0
        %2175 = vmatprep.subr.bf16.mxu0 0
        %2176 = vmatpush1.bf16.msra.mxu0 0
        %2177 = vmatprep.subr.bf16.mxu0 0
        %2178 = vmatpush1.bf16.msra.mxu0 0
        %2179 = vmatprep.subr.bf16.mxu0 0
        %2180 = vmatpush1.bf16.msra.mxu0 0
        %2181 = vmatprep.mubr.bf16.mxu0 0
        %2182 = vmatmul.mubr.bf16.gmra.mrb[0].mxu0 %v2147
        %v2183 = vpop.f32.mrb[0].mxu0
        %v2184 = vadd.f32 %v2132, %v2183
        %v2185 = vpop.f32.mrb[0].mxu0
        %v2186 = vpop.f32.mrb[0].mxu0
        %v2187 = vpop.f32.mrb[0].mxu0
        %2188 = vdwg.mxu0
        %v2189 = vmax.f32 %v2184, 0.0
        %v2190 = vpack.c.bf16 %v2189, %v2189
        %v2191 = vld [vmem:[#allocation23] sm:$0xf]
        %v2192 = vld [vmem:[#allocation23 + $0x4] sm:$0xf]
        %v2193 = vld [vmem:[#allocation23 + $0x8] sm:$0xf]
        %v2194 = vld [vmem:[#allocation23 + $0xc] sm:$0xf]
        %v2195 = vld [vmem:[#allocation23 + $0x10] sm:$0xf]
        %v2196 = vld [vmem:[#allocation23 + $0x14] sm:$0xf]
        %v2197 = vld [vmem:[#allocation23 + $0x18] sm:$0xf]
        %v2198 = vld [vmem:[#allocation23 + $0x1c] sm:$0xf]
        %v2199 = vld [vmem:[#allocation23 + $0x20] sm:$0xf]
        %v2200 = vld [vmem:[#allocation23 + $0x24] sm:$0xf]
        %v2201 = vld [vmem:[#allocation23 + $0x28] sm:$0xf]
        %v2202 = vld [vmem:[#allocation23 + $0x2c] sm:$0xf]
        %v2203 = vld [vmem:[#allocation23 + $0x30] sm:$0xf]
        %v2204 = vld [vmem:[#allocation23 + $0x34] sm:$0xf]
        %v2205 = vld [vmem:[#allocation23 + $0x38] sm:$0xf]
        %v2206 = vld [vmem:[#allocation23 + $0x3c] sm:$0xf]
        %v2207 = vld [vmem:[#allocation25] sm:$0x1]
        %v2209 = vlaneseq
        %v2210 = vshrl.u32 %v2209, 7
        %v2211 = vsub.s32 0, %v2210
        %v2212 = vrot.slane %v2207, %v2211
        %v2230 = vunpack.c.l.b16 %v2191
        %v2231 = vunpack.c.l.b16 %v2192
        %v2232 = vunpack.c.l.b16 %v2193
        %v2233 = vunpack.c.l.b16 %v2194
        %v2234 = vunpack.c.l.b16 %v2195
        %v2235 = vunpack.c.l.b16 %v2196
        %v2236 = vunpack.c.l.b16 %v2197
        %v2237 = vunpack.c.l.b16 %v2198
        %v2238 = vunpack.c.l.b16 %v2199
        %v2239 = vunpack.c.l.b16 %v2200
        %v2240 = vunpack.c.l.b16 %v2201
        %v2241 = vunpack.c.l.b16 %v2202
        %v2242 = vunpack.c.l.b16 %v2203
        %v2243 = vunpack.c.l.b16 %v2204
        %v2244 = vunpack.c.l.b16 %v2205
        %v2245 = vunpack.c.l.b16 %v2206
        %v2246 = vpack.c.b16 %v2231, %v2230
        %v2247 = vpack.c.b16 %v2233, %v2232
        %v2248 = vpack.c.b16 %v2235, %v2234
        %v2249 = vpack.c.b16 %v2237, %v2236
        %v2250 = vpack.c.b16 %v2239, %v2238
        %v2251 = vpack.c.b16 %v2241, %v2240
        %v2252 = vpack.c.b16 %v2243, %v2242
        %v2253 = vpack.c.b16 %v2245, %v2244
        %2262 = vmatprep.subr.bf16.mxu0 0
        %2263 = vmatpush1.bf16.msra.mxu0 %v2246
        %2264 = vmatprep.subr.bf16.mxu0 0
        %2265 = vmatpush1.bf16.msra.mxu0 %v2247
        %2266 = vmatprep.subr.bf16.mxu0 0
        %2267 = vmatpush1.bf16.msra.mxu0 %v2248
        %2268 = vmatprep.subr.bf16.mxu0 0
        %2269 = vmatpush1.bf16.msra.mxu0 %v2249
        %2270 = vmatprep.subr.bf16.mxu0 0
        %2271 = vmatpush1.bf16.msra.mxu0 %v2250
        %2272 = vmatprep.subr.bf16.mxu0 0
        %2273 = vmatpush1.bf16.msra.mxu0 %v2251
        %2274 = vmatprep.subr.bf16.mxu0 0
        %2275 = vmatpush1.bf16.msra.mxu0 %v2252
        %2276 = vmatprep.subr.bf16.mxu0 0
        %2277 = vmatpush1.bf16.msra.mxu0 %v2253
        %2278 = vmatprep.subr.bf16.mxu0 0
        %2279 = vmatpush1.bf16.msra.mxu0 0
        %2280 = vmatprep.subr.bf16.mxu0 0
        %2281 = vmatpush1.bf16.msra.mxu0 0
        %2282 = vmatprep.subr.bf16.mxu0 0
        %2283 = vmatpush1.bf16.msra.mxu0 0
        %2284 = vmatprep.subr.bf16.mxu0 0
        %2285 = vmatpush1.bf16.msra.mxu0 0
        %2286 = vmatprep.subr.bf16.mxu0 0
        %2287 = vmatpush1.bf16.msra.mxu0 0
        %2288 = vmatprep.subr.bf16.mxu0 0
        %2289 = vmatpush1.bf16.msra.mxu0 0
        %2290 = vmatprep.subr.bf16.mxu0 0
        %2291 = vmatpush1.bf16.msra.mxu0 0
        %2292 = vmatprep.subr.bf16.mxu0 0
        %2293 = vmatpush1.bf16.msra.mxu0 0
        %2294 = vmatprep.mubr.bf16.mxu0 0
        %2295 = vmatmul.mubr.bf16.gmra.mrb[0].mxu0 %v2190
        %v2296 = vpop.f32.mrb[0].mxu0
        %v2297 = vadd.f32 %v2212, %v2296
        %v2298 = vpop.f32.mrb[0].mxu0
        %v2299 = vpop.f32.mrb[0].mxu0
        %v2300 = vpop.f32.mrb[0].mxu0
        %2301 = vdwg.mxu0
        %v2302 = vadd.f32 %v2297, %v2121
        %v2303 = vld [vmem:[#allocation26] sm:$0x1]
        %v2304 = vld [vmem:[#allocation28] sm:$0x1]
        %v2305 = vsel %vm2074, %v2302, 0.0
        %2306 = vadd.xlane.f32.xlu0 %v2305
        %v2307 = vpop.xlane.xlu0 %2306
        %v2308 = vmul.f32 %v2307, %v2097
        %v2309 = vsub.f32 %v2302, %v2308
        %v2310 = vmul.f32 %v2309, %v2309
        %v2311 = vsel %vm2074, %v2310, 0.0
        %2312 = vadd.xlane.f32.xlu0 %v2311
        %v2313 = vpop.xlane.xlu0 %2312
        %v2314 = vmul.f32 %v2313, %v2097
        %v2315 = vadd.f32 %v2314, 1e-05
        %v2316 = vrsqrt.pop %v2315
        %v2317 = vmul.f32 %v2309, %v2316
        %v2319 = vlaneseq
        %v2320 = vshrl.u32 %v2319, 7
        %v2321 = vsub.s32 0, %v2320
        %v2322 = vrot.slane %v2303, %v2321
        %v2324 = vmul.f32 %v2317, %v2322
        %v2326 = vlaneseq
        %v2327 = vshrl.u32 %v2326, 7
        %v2328 = vsub.s32 0, %v2327
        %v2329 = vrot.slane %v2304, %v2328
        %v2331 = vadd.f32 %v2324, %v2329
        %2332 = vst.msk [vmem:[%s874] sm:$0xff] %vm2074, %v2331
        %s2333 = sand.u32 %s449, 1
        %s2334 = scalar_lea.sflag [#allocation4], %s2333
        %s2335 = sand.u32 %s449, 1
        %s2336 = smul.addr %s2335, 8
        %s2337 = scalar_lea.vmem [#allocation29], %s2336
        // Predicated region
        $region157: #{transformer_block.1} parent=87 // pred_check
          %p2338 = pneg %p459
        $region158: #{transformer_block.1} parent=87 // pred_check_branch
          %2340 = sbr.rel (%p2338) target = $region160
        $region159: #{transformer_block.1} parent=87 // pred_region
          %s2342 = ssub.s32 128, 128
          %2343 = vsyncadd %s2334, %s2342
          %s2344 = sadd.s32 %s51, %s50
          %s2345 = smul.addr %s2344, 128
          %s2346 = scalar_lea.hbm %s17, %s2345
          %s2348 = sshll.u32 %s2337, 4
          %s2349 = int_to_ptr.vmem [resolvable:$true] %s2348
          %2351 = dma.vmem_to_hbm [thread:$0]  %s2349, 128, %s2346, %s2334
        $region160: #{transformer_block.1} parent=87 // pred_fallthru
          _
      $region88: #{transformer_block.1} parent=5 // pred_fallthru
        _
      %p2352 = scmp.le.s32.totalorder 2, %s41
      // Predicated region
      $region161: #{transformer_block.1} parent=5 // pred_check
        %p2353 = pneg %p2352
      $region162: #{transformer_block.1} parent=5 // pred_check_branch
        %2355 = sbr.rel (%p2353) target = $region164
      $region163: #{transformer_block.1} parent=5 // pred_region
        %s2356 = ssub.s32 %s41, 2
        // Predicated region
        $region165: #{transformer_block.1} parent=163 // pred_check
          %p2357 = pneg %p465
        $region166: #{transformer_block.1} parent=163 // pred_check_branch
          %2359 = sbr.rel (%p2357) target = $region168
        $region167: #{transformer_block.1} parent=163 // pred_region
          %s2360 = sand.u32 %s450, 1
          %s2361 = scalar_lea.sflag [#allocation4], %s2360
          %s2362 = sand.u32 %s450, 1
          %s2363 = smul.addr %s2362, 8
          %s2364 = scalar_lea.vmem [#allocation29], %s2363
          %2365 = dma.done %s2361, 128
        $region168: #{transformer_block.1} parent=163 // pred_fallthru
          _
      $region164: #{transformer_block.1} parent=5 // pred_fallthru
        _
    $region6: #{transformer_block.1} parent=1 // loop_footer
      %s45 = sadd.s32 1, %s41
    $region7: #{transformer_block.1} parent=1 // loop_footer_branch
      %40 = sbr.rel target = $region3
    $region8: #{transformer_block.1} parent=1 // loop_exit
      _
    %2366 = vsyncpa [#allocation3], 1
    %s2367 = scalar_lea.sflag [#allocation3], 1
    %2368 = vsyncpa %s2367, 1
    %2369 = vsyncpa [#allocation6], 1
    %s2370 = scalar_lea.sflag [#allocation6], 1
    %2371 = vsyncpa %s2370, 1
    %2372 = vsyncpa [#allocation9], 1
    %s2373 = scalar_lea.sflag [#allocation9], 1
    %2374 = vsyncpa %s2373, 1
    %2375 = vsyncpa [#allocation12], 1
    %2376 = vsyncpa [#allocation15], 1
    %2377 = vsyncpa [#allocation18], 1
    %2378 = vsyncpa [#allocation21], 1
    %2379 = vsyncpa [#allocation24], 1
    %2380 = vsyncpa [#allocation27], 1
    %2381 = vsyncpa [#allocation4], 1
    %s2382 = scalar_lea.sflag [#allocation4], 1
    %2383 = vsyncpa %s2382, 1

</llo_original>
